<compile_context>
chip_gen: v5e
topology: v5e:2x2
jax: 0.10.0
libtpu: 0.0.40
codegen_flags: <defaults>
</compile_context>

<pallas_src>
import functools

import jax
import jax.numpy as jnp
from jax.experimental import pallas as pl
from jax.experimental.pallas import tpu as pltpu


def _round_up(value, multiple):
    return ((value + multiple - 1) // multiple) * multiple


# ---------------------------------------------------------------------------
# Kernels
# ---------------------------------------------------------------------------
def _fast_nn_kernel(x_ref, w1_ref, w2_ref, x1_ref, x2_ref):
    """Resident-weight path: one x-tile read feeds both projections."""
    x = x_ref[...]
    x1_ref[...] = jnp.dot(
        x, w1_ref[...], preferred_element_type=jnp.float32
    ).astype(x1_ref.dtype)
    x2_ref[...] = jnp.dot(
        x, w2_ref[...], preferred_element_type=jnp.float32
    ).astype(x2_ref.dtype)


def _fast_nn_kstream_kernel(x_ref, w1_ref, w2_ref, x1_ref, x2_ref,
                            acc1_ref, acc2_ref, *, p_total, k_tile):
    """K-streaming path for very wide p: f32 accumulators, masked K tail."""
    k = pl.program_id(1)

    @pl.when(k == 0)
    def _():
        acc1_ref[...] = jnp.zeros_like(acc1_ref)
        acc2_ref[...] = jnp.zeros_like(acc2_ref)

    # The last K block may overhang p; the overhanging VMEM region holds
    # garbage (never assume it is zero).  Zero BOTH sides before the MXU so a
    # garbage NaN/Inf cannot leak in via 0 * NaN.
    valid = p_total - k * k_tile
    x = x_ref[...]
    col = jax.lax.broadcasted_iota(jnp.int32, x.shape, 1)
    x = jnp.where(col < valid, x, jnp.zeros_like(x))

    w1 = w1_ref[...]
    row1 = jax.lax.broadcasted_iota(jnp.int32, w1.shape, 0)
    w1 = jnp.where(row1 < valid, w1, jnp.zeros_like(w1))

    w2 = w2_ref[...]
    row2 = jax.lax.broadcasted_iota(jnp.int32, w2.shape, 0)
    w2 = jnp.where(row2 < valid, w2, jnp.zeros_like(w2))

    acc1_ref[...] += jnp.dot(x, w1, preferred_element_type=jnp.float32)
    acc2_ref[...] += jnp.dot(x, w2, preferred_element_type=jnp.float32)

    @pl.when(k == pl.num_programs(1) - 1)
    def _():
        x1_ref[...] = acc1_ref[...].astype(x1_ref.dtype)
        x2_ref[...] = acc2_ref[...].astype(x2_ref.dtype)


# ---------------------------------------------------------------------------
# Generation-aware sizing
# ---------------------------------------------------------------------------
def _vmem_budget_and_cores():
    """VMEM limit / buffer budget / TensorCore count, generation-aware."""
    vmem_cap = 64 * 1024 * 1024   # conservative default (v7x per-TC VMEM)
    num_cores = 1
    try:
        info = pltpu.get_tpu_info()
        cap = getattr(info, "vmem_capacity_bytes", None)
        if cap:
            vmem_cap = int(cap)
        for attr in ("num_cores", "tensorcores_per_chip", "core_count"):
            val = getattr(info, attr, None)
            if val:
                num_cores = int(val)
                break
    except Exception:
        pass
    vmem_limit = max(32 * 1024 * 1024,
                     min((vmem_cap * 3) // 4, 100 * 1024 * 1024))
    budget = vmem_limit - 6 * 1024 * 1024
    return vmem_limit, budget, num_cores


def _pick_m_tile(fitting, batch, num_cores):
    fitting = sorted(fitting, reverse=True)
    if num_cores <= 1:
        return fitting[0]          # single TC: largest tile, fewest grid steps
    for bt in fitting:             # multi TC: balanced (even) step counts first
        steps = pl.cdiv(batch, bt)
        if steps >= num_cores and steps % num_cores == 0:
            return bt
    for bt in fitting:
        if pl.cdiv(batch, bt) >= num_cores:
            return bt
    return fitting[0]


def _choose_tiles(batch, p, r_bar, width, itemsize, budget, num_cores,
                  force_k_tile=None):
    """Returns (batch_tile, k_tile); k_tile is None when full p stays resident."""
    lanes = lambda v: _round_up(v, 128)
    n_out_lanes = lanes(r_bar) + lanes(width)

    def x_bytes(bt, kt):      # double-buffered x tile (lane-padded in VMEM)
        return 2 * bt * lanes(kt) * itemsize

    def w_bytes(kt, nbuf):    # resident weights (single- or double-buffered)
        return nbuf * _round_up(kt, 8) * n_out_lanes * itemsize

    def out_bytes(bt):        # double-buffered outputs
        return 2 * bt * n_out_lanes * 4

    def acc_bytes(bt):        # f32 accumulators (K-streaming only)
        return bt * n_out_lanes * 4

    m_cap = _round_up(batch, 8)
    m_candidates = [bt for bt in (1024, 512, 256, 128, 64, 32, 16, 8)
                    if bt <= m_cap] or [8]

    if force_k_tile is None:
        fitting = [bt for bt in m_candidates
                   if x_bytes(bt, p) + w_bytes(p, 1) + out_bytes(bt) <= budget]
        if fitting:
            return _pick_m_tile(fitting, batch, num_cores), None

    # K-streaming fallback: keep the batch tile reasonably large and stream p.
    k_candidates = ([int(force_k_tile)] if force_k_tile is not None
                    else [kt for kt in (2048, 1024, 512, 256, 128) if kt < p]
                    or [128])
    for bt in ([c for c in m_candidates if c <= 512] or m_candidates[-1:]):
        for kt in k_candidates:
            need = (x_bytes(bt, kt) + w_bytes(kt, 2)
                    + out_bytes(bt) + acc_bytes(bt))
            if need <= budget:
                return bt, kt
    return m_candidates[-1], k_candidates[-1]


# ---------------------------------------------------------------------------
# Wrapper
# ---------------------------------------------------------------------------
def factor_augmented_sparse_throughput(x, dp_mat, vs_weight, *,
                                       _force_k_tile=None):
    """Forward pass of FactorAugmentedSparseThroughput.

    x:         (batch, p)
    dp_mat:    (p, r_bar)   diversified projection matrix (as passed to the
                            module constructor; the module stores its transpose
                            as the Linear weight, so x1 = x @ dp_mat)
    vs_weight: (width, p)   nn.Linear(p, width, bias=False).weight

    Returns (x1, x2) with x1 = x @ dp_mat, x2 = x @ vs_weight.T.
    `_force_k_tile` is a testing hook to exercise the K-streaming path.
    """
    batch, p = x.shape
    r_bar = dp_mat.shape[1]
    width = vs_weight.shape[0]

    compute_dtype = x.dtype
    itemsize = jnp.dtype(compute_dtype).itemsize
    w1 = dp_mat.astype(compute_dtype)                     # (p, r_bar)
    # Fold the nn.Linear transpose once, outside the kernel.  If the weights
    # are reused across calls, hoist/cache this (p, width) array at the caller.
    w2 = jnp.transpose(vs_weight).astype(compute_dtype)   # (p, width)

    vmem_limit, budget, num_cores = _vmem_budget_and_cores()
    batch_tile, k_tile = _choose_tiles(batch, p, r_bar, width, itemsize,
                                       budget, num_cores, _force_k_tile)
    m_steps = pl.cdiv(batch, batch_tile)

    out_shape = (jax.ShapeDtypeStruct((batch, r_bar), compute_dtype),
                 jax.ShapeDtypeStruct((batch, width), compute_dtype))
    cost = pl.CostEstimate(
        flops=2 * batch * p * (r_bar + width),
        transcendentals=0,
        bytes_accessed=itemsize * (batch * p + p * (r_bar + width)
                                   + batch * (r_bar + width)),
    )

    if k_tile is None:
        # ----- Resident-weight path (common case) ---------------------------
        def build(single_buffer_weights):
            w_kwargs = {}
            if single_buffer_weights and hasattr(pl, "Buffered"):
                # Weight block index is constant -> one buffer is enough.
                w_kwargs["pipeline_mode"] = pl.Buffered(1)
            grid_spec = pltpu.PrefetchScalarGridSpec(
                num_scalar_prefetch=0,
                grid=(m_steps,),
                in_specs=[
                    pl.BlockSpec((batch_tile, p), lambda i: (i, 0)),
                    pl.BlockSpec((p, r_bar), lambda i: (0, 0), **w_kwargs),
                    pl.BlockSpec((p, width), lambda i: (0, 0), **w_kwargs),
                ],
                out_specs=[
                    pl.BlockSpec((batch_tile, r_bar), lambda i: (i, 0)),
                    pl.BlockSpec((batch_tile, width), lambda i: (i, 0)),
                ],
            )
            return pl.pallas_call(
                _fast_nn_kernel,
                out_shape=out_shape,
                grid_spec=grid_spec,
                compiler_params=pltpu.CompilerParams(
                    dimension_semantics=("parallel",),
                    vmem_limit_bytes=vmem_limit),
                cost_estimate=cost,
            )

        err = None
        for single_buffer_weights in (True, False):
            try:
                return build(single_buffer_weights)(x, w1, w2)
            except Exception as e:   # pl.Buffered(1) unsupported -> double-buffer
                err = e
        raise err

    # ----- K-streaming path (very wide p) -----------------------------------
    k_steps = pl.cdiv(p, k_tile)
    kernel = functools.partial(_fast_nn_kstream_kernel, p_total=p, k_tile=k_tile)
    grid_spec = pltpu.PrefetchScalarGridSpec(
        num_scalar_prefetch=0,
        grid=(m_steps, k_steps),
        in_specs=[
            pl.BlockSpec((batch_tile, k_tile), lambda i, k: (i, k)),
            pl.BlockSpec((k_tile, r_bar), lambda i, k: (k, 0)),
            pl.BlockSpec((k_tile, width), lambda i, k: (k, 0)),
        ],
        out_specs=[
            pl.BlockSpec((batch_tile, r_bar), lambda i, k: (i, 0)),
            pl.BlockSpec((batch_tile, width), lambda i, k: (i, 0)),
        ],
        scratch_shapes=[
            pltpu.VMEM((batch_tile, r_bar), jnp.float32),
            pltpu.VMEM((batch_tile, width), jnp.float32),
        ],
    )
    return pl.pallas_call(
        kernel,
        out_shape=out_shape,
        grid_spec=grid_spec,
        compiler_params=pltpu.CompilerParams(
            dimension_semantics=("parallel", "arbitrary"),
            vmem_limit_bytes=vmem_limit),
        cost_estimate=cost,
    )(x, w1, w2)


# ---------------------------------------------------------------------------
# Demo / self-check
# ---------------------------------------------------------------------------
def _reference(x, dp_mat, vs_weight):
    hi = jax.lax.Precision.HIGHEST
    return (jnp.matmul(x, dp_mat, precision=hi),
            jnp.matmul(x, vs_weight.T, precision=hi))


if __name__ == "__main__":
    key = jax.random.PRNGKey(0)
    k1, k2, k3, k4, k5, k6 = jax.random.split(key, 6)

    # Case 1: resident-weight path; batch not a multiple of the tile so the
    # final partial batch block (masked output store) is exercised.
    batch, p, r_bar, width = 72, 48, 4, 16
    x = jax.random.normal(k1, (batch, p), dtype=jnp.float32)
    dp_mat = jax.random.normal(k2, (p, r_bar), dtype=jnp.float32)      # (p, r_bar)
    vs_weight = jax.random.normal(k3, (width, p), dtype=jnp.float32)   # (width, p)

    x1, x2 = factor_augmented_sparse_throughput(x, dp_mat, vs_weight)
    jax.block_until_ready((x1, x2))
    x1_ref, x2_ref = _reference(x, dp_mat, vs_weight)
    assert x1.shape == (batch, r_bar) and x2.shape == (batch, width)
    assert jnp.allclose(x1, x1_ref, atol=5e-2, rtol=1e-2)
    assert jnp.allclose(x2, x2_ref, atol=5e-2, rtol=1e-2)

    # Case 2: force the K-streaming path (p=200, k_tile=128 -> masked K tail).
    batch2, p2 = 32, 200
    x_b = jax.random.normal(k4, (batch2, p2), dtype=jnp.float32)
    dp_b = jax.random.normal(k5, (p2, r_bar), dtype=jnp.float32)
    vs_b = jax.random.normal(k6, (width, p2), dtype=jnp.float32)
    y1, y2 = factor_augmented_sparse_throughput(x_b, dp_b, vs_b,
                                                _force_k_tile=128)
    jax.block_until_ready((y1, y2))
    y1_ref, y2_ref = _reference(x_b, dp_b, vs_b)
    assert jnp.allclose(y1, y1_ref, atol=5e-2, rtol=1e-2)
    assert jnp.allclose(y2, y2_ref, atol=5e-2, rtol=1e-2)

    print("KERNEL_OK")
</pallas_src>

<mosaic_0001>
module attributes {stable_mosaic.version = 11 : i64} {
  func.func @_fast_nn_kernel(%arg0: i32, %arg1: memref<64x48xf32, #tpu.memory_space<vmem>>, %arg2: memref<48x4xf32, #tpu.memory_space<vmem>>, %arg3: memref<48x16xf32, #tpu.memory_space<vmem>>, %arg4: memref<64x4xf32, #tpu.memory_space<vmem>>, %arg5: memref<64x16xf32, #tpu.memory_space<vmem>>) attributes {dimension_semantics = [#tpu.dimension_semantics<parallel>], iteration_bounds = array<i64: 2>, scalar_prefetch = 0 : i64, scratch_operands = 0 : i64, tpu.core_type = #tpu.core_type<tc>, window_params = [{transform_indices = @transform_0, window_bounds = array<i64: 64, 48>}, {pipeline_mode = #tpu.pipeline_mode<synchronous>, transform_indices = @transform_1, window_bounds = array<i64: 48, 4>}, {pipeline_mode = #tpu.pipeline_mode<synchronous>, transform_indices = @transform_2, window_bounds = array<i64: 48, 16>}, {transform_indices = @transform_3, window_bounds = array<i64: 64, 4>}, {transform_indices = @transform_4, window_bounds = array<i64: 64, 16>}]} {
    %c0 = arith.constant 0 : index
    %c0_0 = arith.constant 0 : index
    %0 = vector.load %arg1[%c0, %c0_0] : memref<64x48xf32, #tpu.memory_space<vmem>>, vector<64x48xf32>
    %c0_1 = arith.constant 0 : index
    %c0_2 = arith.constant 0 : index
    %1 = vector.load %arg2[%c0_1, %c0_2] : memref<48x4xf32, #tpu.memory_space<vmem>>, vector<48x4xf32>
    %cst = arith.constant dense<0.000000e+00> : vector<64x4xf32>
    %2 = tpu.matmul %0, %1, %cst {dimension_numbers = #tpu.dot_dimension_numbers<[1], [0], [0], [1], [0, 0, 1, 1], [], []>} : vector<64x48xf32>, vector<48x4xf32>, vector<64x4xf32> -> vector<64x4xf32>
    %c0_3 = arith.constant 0 : index
    %c0_4 = arith.constant 0 : index
    %3 = vector.load %arg4[%c0_3, %c0_4] : memref<64x4xf32, #tpu.memory_space<vmem>>, vector<64x4xf32>
    tpu.vector_store %arg4[%c0_3, %c0_4], %2 {strides = array<i32>} : memref<64x4xf32, #tpu.memory_space<vmem>>, vector<64x4xf32>,
    %c0_5 = arith.constant 0 : index
    %c0_6 = arith.constant 0 : index
    %4 = vector.load %arg3[%c0_5, %c0_6] : memref<48x16xf32, #tpu.memory_space<vmem>>, vector<48x16xf32>
    %cst_7 = arith.constant dense<0.000000e+00> : vector<64x16xf32>
    %5 = tpu.matmul %0, %4, %cst_7 {dimension_numbers = #tpu.dot_dimension_numbers<[1], [0], [0], [1], [0, 0, 1, 1], [], []>} : vector<64x48xf32>, vector<48x16xf32>, vector<64x16xf32> -> vector<64x16xf32>
    %c0_8 = arith.constant 0 : index
    %c0_9 = arith.constant 0 : index
    %6 = vector.load %arg5[%c0_8, %c0_9] : memref<64x16xf32, #tpu.memory_space<vmem>>, vector<64x16xf32>
    tpu.vector_store %arg5[%c0_8, %c0_9], %5 {strides = array<i32>} : memref<64x16xf32, #tpu.memory_space<vmem>>, vector<64x16xf32>,
    return
  }
  func.func @transform_0(%arg0: i32) -> (i32, i32) {
    %c0_i32 = arith.constant 0 : i32
    %c0_i32_0 = arith.constant 0 : i32
    return %arg0, %c0_i32 : i32, i32
  }
  func.func @transform_1(%arg0: i32) -> (i32, i32) {
    %c0_i32 = arith.constant 0 : i32
    %c0_i32_0 = arith.constant 0 : i32
    %c0_i32_1 = arith.constant 0 : i32
    return %c0_i32, %c0_i32_0 : i32, i32
  }
  func.func @transform_2(%arg0: i32) -> (i32, i32) {
    %c0_i32 = arith.constant 0 : i32
    %c0_i32_0 = arith.constant 0 : i32
    %c0_i32_1 = arith.constant 0 : i32
    return %c0_i32, %c0_i32_0 : i32, i32
  }
  func.func @transform_3(%arg0: i32) -> (i32, i32) {
    %c0_i32 = arith.constant 0 : i32
    %c0_i32_0 = arith.constant 0 : i32
    return %arg0, %c0_i32 : i32, i32
  }
  func.func @transform_4(%arg0: i32) -> (i32, i32) {
    %c0_i32 = arith.constant 0 : i32
    %c0_i32_0 = arith.constant 0 : i32
    return %arg0, %c0_i32 : i32, i32
  }
}

module attributes {stable_mosaic.version = 11 : i64} {
  func.func @_fast_nn_kernel(%arg0: i32, %arg1: memref<64x48xf32, #tpu.memory_space<vmem>>, %arg2: memref<48x4xf32, #tpu.memory_space<vmem>>, %arg3: memref<48x16xf32, #tpu.memory_space<vmem>>, %arg4: memref<64x4xf32, #tpu.memory_space<vmem>>, %arg5: memref<64x16xf32, #tpu.memory_space<vmem>>) attributes {dimension_semantics = [#tpu.dimension_semantics<parallel>], iteration_bounds = array<i64: 2>, scalar_prefetch = 0 : i64, scratch_operands = 0 : i64, tpu.core_type = #tpu.core_type<tc>, window_params = [{transform_indices = @transform_0, window_bounds = array<i64: 64, 48>}, {pipeline_mode = #tpu.pipeline_mode<synchronous>, transform_indices = @transform_1, window_bounds = array<i64: 48, 4>}, {pipeline_mode = #tpu.pipeline_mode<synchronous>, transform_indices = @transform_2, window_bounds = array<i64: 48, 16>}, {transform_indices = @transform_3, window_bounds = array<i64: 64, 4>}, {transform_indices = @transform_4, window_bounds = array<i64: 64, 16>}]} {
    %c0 = arith.constant 0 : index
    %c0_0 = arith.constant 0 : index
    %0 = vector.load %arg1[%c0, %c0_0] : memref<64x48xf32, #tpu.memory_space<vmem>>, vector<64x48xf32>
    %c0_1 = arith.constant 0 : index
    %c0_2 = arith.constant 0 : index
    %1 = vector.load %arg2[%c0_1, %c0_2] : memref<48x4xf32, #tpu.memory_space<vmem>>, vector<48x4xf32>
    %cst = arith.constant dense<0.000000e+00> : vector<64x4xf32>
    %2 = tpu.matmul %0, %1, %cst {dimension_numbers = #tpu.dot_dimension_numbers<[1], [0], [0], [1], [0, 0, 1, 1], [], []>} : vector<64x48xf32>, vector<48x4xf32>, vector<64x4xf32> -> vector<64x4xf32>
    %c0_3 = arith.constant 0 : index
    %c0_4 = arith.constant 0 : index
    %3 = vector.load %arg4[%c0_3, %c0_4] : memref<64x4xf32, #tpu.memory_space<vmem>>, vector<64x4xf32>
    tpu.vector_store %arg4[%c0_3, %c0_4], %2 {strides = array<i32>} : memref<64x4xf32, #tpu.memory_space<vmem>>, vector<64x4xf32>,
    %c0_5 = arith.constant 0 : index
    %c0_6 = arith.constant 0 : index
    %4 = vector.load %arg3[%c0_5, %c0_6] : memref<48x16xf32, #tpu.memory_space<vmem>>, vector<48x16xf32>
    %cst_7 = arith.constant dense<0.000000e+00> : vector<64x16xf32>
    %5 = tpu.matmul %0, %4, %cst_7 {dimension_numbers = #tpu.dot_dimension_numbers<[1], [0], [0], [1], [0, 0, 1, 1], [], []>} : vector<64x48xf32>, vector<48x16xf32>, vector<64x16xf32> -> vector<64x16xf32>
    %c0_8 = arith.constant 0 : index
    %c0_9 = arith.constant 0 : index
    %6 = vector.load %arg5[%c0_8, %c0_9] : memref<64x16xf32, #tpu.memory_space<vmem>>, vector<64x16xf32>
    tpu.vector_store %arg5[%c0_8, %c0_9], %5 {strides = array<i32>} : memref<64x16xf32, #tpu.memory_space<vmem>>, vector<64x16xf32>,
    return
  }
  func.func @transform_0(%arg0: i32) -> (i32, i32) {
    %c0_i32 = arith.constant 0 : i32
    %c0_i32_0 = arith.constant 0 : i32
    return %arg0, %c0_i32 : i32, i32
  }
  func.func @transform_1(%arg0: i32) -> (i32, i32) {
    %c0_i32 = arith.constant 0 : i32
    %c0_i32_0 = arith.constant 0 : i32
    %c0_i32_1 = arith.constant 0 : i32
    return %c0_i32, %c0_i32_0 : i32, i32
  }
  func.func @transform_2(%arg0: i32) -> (i32, i32) {
    %c0_i32 = arith.constant 0 : i32
    %c0_i32_0 = arith.constant 0 : i32
    %c0_i32_1 = arith.constant 0 : i32
    return %c0_i32, %c0_i32_0 : i32, i32
  }
  func.func @transform_3(%arg0: i32) -> (i32, i32) {
    %c0_i32 = arith.constant 0 : i32
    %c0_i32_0 = arith.constant 0 : i32
    return %arg0, %c0_i32 : i32, i32
  }
  func.func @transform_4(%arg0: i32) -> (i32, i32) {
    %c0_i32 = arith.constant 0 : i32
    %c0_i32_0 = arith.constant 0 : i32
    return %arg0, %c0_i32 : i32, i32
  }
}

</mosaic_0001>

<llo_original>
// kernel: tpu_custom_call.1
$region0: #{tpu_custom_call.1}
  #allocation0 [shape = 'u32[]', space=smem, size = 0x4, offset = 0x4, fixed_abs, tag = 'smem constant byte address 0x4 - core index']
  #allocation1 [shape = 'u32[72,128]{1,0:T(1,128)}', space=vmem, size = 0x9000, scoped, tag = 'internal scratch']
  %s0 = inlined_call_operand.vmem [shape: f32[72,48], index: 0, kind: input, shape index: {}]
  %s1 = inlined_call_operand.vmem [shape: f32[48,4], index: 1, kind: input, shape index: {}]
  %s2 = inlined_call_operand.vmem [shape: f32[48,16], index: 2, kind: input, shape index: {}]
  %s3 = inlined_call_operand.vmem [shape: f32[72,4], index: 3, kind: output, shape index: {0}]
  %s4 = inlined_call_operand.vmem [shape: f32[72,16], index: 4, kind: output, shape index: {1}]
  %5 = xla_tuple %s3, %s4
  %s6 = sld [smem:[#allocation0]]
  $region149: #{tpu_custom_call.1} parent=0
    _
  %s8 = ssub.s32 1, %s6
  %s9 = scalar_select 0, %s8, %s6
  $region1: #{tpu_custom_call.1} parent=0
    #allocation2 [shape = 'u8[65536]{0}', space=vmem, size = 0x10000, scoped, tag = 'output window, operand 0']
    #allocation3 [shape = 'u8[65536]{0}', space=vmem, size = 0x10000, scoped, tag = 'output window, operand 1']
    loop: start=0, step=1, limit=4
    $region2: #{tpu_custom_call.1} parent=1 // loop_pre_header
      _
    $region3: #{tpu_custom_call.1} parent=1 // loop_header
      %s11 = sphi 0, %s15
      %p12 = scmp.ge.s32.totalorder %s11, 4
      %s21 = sphi 0, %s23
      %s24 = sphi 0, %s21
      %s25 = sphi 0, %s24
      %s41 = sphi 0, %s25
      %s45 = sphi 0, %s45
      %s47 = sphi 0, %s45
      %s48 = sphi 0, %s47
      %s62 = sphi 0, %s48
      %s66 = sphi 0, %s66
      %s68 = sphi 0, %s66
      %s69 = sphi 0, %s68
      %s83 = sphi 0, %s69
      %s89 = sphi 0, %s91
      %s92 = sphi 0, %s89
      %s93 = sphi 0, %s92
      %s109 = sphi 0, %s93
      %s115 = sphi 0, %s117
      %s118 = sphi 0, %s115
      %s119 = sphi 0, %s118
      %s135 = sphi 0, %s119
    $region4: #{tpu_custom_call.1} parent=1 // loop_header_branch
      %14 = sbr.rel (%p12) target = $region8
    $region5: #{tpu_custom_call.1} parent=1 // loop_body
      %s16 = ssub.s32 %s11, 1
      %s17 = ssub.s32 %s11, 2
      %s18 = sadd.s32 %s11, 1
      %s19 = ssub.s32 %s11, %s18
      %p20 = scmp.eq.s32.totalorder %s19, 0
      %s22 = sadd.s32 %s21, 1
      %s23 = scalar_select %p20, %s21, %s22
      %p26 = pneg %p20
      %p27 = scmp.eq.s32.totalorder %s11, 1
      %p28 = por %p26, %p27
      %p29 = scmp.ne.s32.totalorder %s21, %s24
      %p30 = scmp.eq.s32.totalorder %s11, 0
      %p31 = por %p29, %p30
      %p32 = scmp.ne.s32.totalorder %s21, %s24
      %p33 = scmp.eq.s32.totalorder %s16, 1
      %p34 = por %p32, %p33
      %p35 = scmp.ne.s32.totalorder %s24, %s25
      %p36 = scmp.eq.s32.totalorder %s16, 0
      %p37 = por %p35, %p36
      %p38 = scmp.ne.s32.totalorder %s24, %s25
      %p39 = scmp.eq.s32.totalorder %s17, 1
      %p40 = por %p38, %p39
      %p42 = scmp.ne.s32.totalorder %s25, %s41
      %p43 = scmp.eq.s32.totalorder %s17, 0
      %p44 = por %p42, %p43
      %s46 = sadd.s32 %s45, 1
      %p49 = scmp.eq.s32.totalorder %s11, 1
      %p50 = scmp.ne.s32.totalorder %s45, %s47
      %p51 = scmp.eq.s32.totalorder %s11, 0
      %p52 = por %p50, %p51
      %p53 = scmp.ne.s32.totalorder %s45, %s47
      %p54 = scmp.eq.s32.totalorder %s16, 1
      %p55 = por %p53, %p54
      %p56 = scmp.ne.s32.totalorder %s47, %s48
      %p57 = scmp.eq.s32.totalorder %s16, 0
      %p58 = por %p56, %p57
      %p59 = scmp.ne.s32.totalorder %s47, %s48
      %p60 = scmp.eq.s32.totalorder %s17, 1
      %p61 = por %p59, %p60
      %p63 = scmp.ne.s32.totalorder %s48, %s62
      %p64 = scmp.eq.s32.totalorder %s17, 0
      %p65 = por %p63, %p64
      %s67 = sadd.s32 %s66, 1
      %p70 = scmp.eq.s32.totalorder %s11, 1
      %p71 = scmp.ne.s32.totalorder %s66, %s68
      %p72 = scmp.eq.s32.totalorder %s11, 0
      %p73 = por %p71, %p72
      %p74 = scmp.ne.s32.totalorder %s66, %s68
      %p75 = scmp.eq.s32.totalorder %s16, 1
      %p76 = por %p74, %p75
      %p77 = scmp.ne.s32.totalorder %s68, %s69
      %p78 = scmp.eq.s32.totalorder %s16, 0
      %p79 = por %p77, %p78
      %p80 = scmp.ne.s32.totalorder %s68, %s69
      %p81 = scmp.eq.s32.totalorder %s17, 1
      %p82 = por %p80, %p81
      %p84 = scmp.ne.s32.totalorder %s69, %s83
      %p85 = scmp.eq.s32.totalorder %s17, 0
      %p86 = por %p84, %p85
      %s87 = ssub.s32 %s11, %s18
      %p88 = scmp.eq.s32.totalorder %s87, 0
      %s90 = sadd.s32 %s89, 1
      %s91 = scalar_select %p88, %s89, %s90
      %p94 = pneg %p88
      %p95 = scmp.eq.s32.totalorder %s11, 1
      %p96 = por %p94, %p95
      %p97 = scmp.ne.s32.totalorder %s89, %s92
      %p98 = scmp.eq.s32.totalorder %s11, 0
      %p99 = por %p97, %p98
      %p100 = scmp.ne.s32.totalorder %s89, %s92
      %p101 = scmp.eq.s32.totalorder %s16, 1
      %p102 = por %p100, %p101
      %p103 = scmp.ne.s32.totalorder %s92, %s93
      %p104 = scmp.eq.s32.totalorder %s16, 0
      %p105 = por %p103, %p104
      %p106 = scmp.ne.s32.totalorder %s92, %s93
      %p107 = scmp.eq.s32.totalorder %s17, 1
      %p108 = por %p106, %p107
      %p110 = scmp.ne.s32.totalorder %s93, %s109
      %p111 = scmp.eq.s32.totalorder %s17, 0
      %p112 = por %p110, %p111
      %s113 = ssub.s32 %s11, %s18
      %p114 = scmp.eq.s32.totalorder %s113, 0
      %s116 = sadd.s32 %s115, 1
      %s117 = scalar_select %p114, %s115, %s116
      %p120 = pneg %p114
      %p121 = scmp.eq.s32.totalorder %s11, 1
      %p122 = por %p120, %p121
      %p123 = scmp.ne.s32.totalorder %s115, %s118
      %p124 = scmp.eq.s32.totalorder %s11, 0
      %p125 = por %p123, %p124
      %p126 = scmp.ne.s32.totalorder %s115, %s118
      %p127 = scmp.eq.s32.totalorder %s16, 1
      %p128 = por %p126, %p127
      %p129 = scmp.ne.s32.totalorder %s118, %s119
      %p130 = scmp.eq.s32.totalorder %s16, 0
      %p131 = por %p129, %p130
      %p132 = scmp.ne.s32.totalorder %s118, %s119
      %p133 = scmp.eq.s32.totalorder %s17, 1
      %p134 = por %p132, %p133
      %p136 = scmp.ne.s32.totalorder %s119, %s135
      %p137 = scmp.eq.s32.totalorder %s17, 0
      %p138 = por %p136, %p137
      %p139 = scmp.le.s32.totalorder 1, %s11
      %p140 = scmp.lt.s32.totalorder %s11, 3
      %p141 = pnand %p139, %p140
      %p142 = pneg %p141
      // Predicated region
      $region9: #{tpu_custom_call.1} parent=5 // pred_check
        _
      $region10: #{tpu_custom_call.1} parent=5 // pred_check_branch
        %144 = sbr.rel (%p141) target = $region12
      $region11: #{tpu_custom_call.1} parent=5 // pred_region
        %s145 = ssub.s32 %s11, 1
        // Predicated region
        $region13: #{tpu_custom_call.1} parent=11 // pred_check
          %p146 = pneg %p58
        $region14: #{tpu_custom_call.1} parent=11 // pred_check_branch
          %148 = sbr.rel (%p146) target = $region16
        $region15: #{tpu_custom_call.1} parent=11 // pred_region
          _
        $region16: #{tpu_custom_call.1} parent=11 // pred_fallthru
          _
        // Predicated region
        $region17: #{tpu_custom_call.1} parent=11 // pred_check
          %p149 = pneg %p79
        $region18: #{tpu_custom_call.1} parent=11 // pred_check_branch
          %151 = sbr.rel (%p149) target = $region20
        $region19: #{tpu_custom_call.1} parent=11 // pred_region
          _
        $region20: #{tpu_custom_call.1} parent=11 // pred_fallthru
          _
      $region12: #{tpu_custom_call.1} parent=5 // pred_fallthru
        _
      %p152 = scmp.lt.s32.totalorder %s11, 2
      // Predicated region
      $region21: #{tpu_custom_call.1} parent=5 // pred_check
        %p153 = pneg %p152
      $region22: #{tpu_custom_call.1} parent=5 // pred_check_branch
        %155 = sbr.rel (%p153) target = $region24
      $region23: #{tpu_custom_call.1} parent=5 // pred_region
        // Predicated region
        $region25: #{tpu_custom_call.1} parent=23 // pred_check
          %p156 = pneg %p31
        $region26: #{tpu_custom_call.1} parent=23 // pred_check_branch
          %158 = sbr.rel (%p156) target = $region28
        $region27: #{tpu_custom_call.1} parent=23 // pred_region
          %s159 = smul.u32 8, %s11
          %s160 = ssub.s32 9, %s159
          %p161 = scmp.lt.s32.totalorder %s160, 8
          %s162 = scalar_select %p161, %s160, 8
          %s163 = smul.u32 8, %s162
          %p164 = scmp.lt.s32.totalorder %s159, 8
          %s165 = scalar_select %p164, %s159, 8
          %s166 = smul.addr %s165, 8
          %s167 = scalar_lea.vmem %s0, %s166
          %s168 = smul.u32 8, %s11
          %s169 = ssub.s32 9, %s168
          %p170 = scmp.lt.s32.totalorder %s169, 8
          %s171 = scalar_select %p170, %s169, 8
          %s172 = smul.u32 8, %s171
        $region28: #{tpu_custom_call.1} parent=23 // pred_fallthru
          _
      $region24: #{tpu_custom_call.1} parent=5 // pred_fallthru
        _
      %p173 = scmp.le.s32.totalorder 1, %s11
      %p174 = scmp.lt.s32.totalorder %s11, 3
      %p175 = pnand %p173, %p174
      %p176 = pneg %p175
      // Predicated region
      $region29: #{tpu_custom_call.1} parent=5 // pred_check
        _
      $region30: #{tpu_custom_call.1} parent=5 // pred_check_branch
        %178 = sbr.rel (%p175) target = $region32
      $region31: #{tpu_custom_call.1} parent=5 // pred_region
        %s179 = ssub.s32 %s11, 1
        %s180 = smul.u32 8, %s16
        %s181 = ssub.s32 9, %s180
        %p182 = scmp.lt.s32.totalorder %s181, 8
        %s183 = scalar_select %p182, %s181, 8
        %s184 = smul.u32 8, %s183
        %p185 = scmp.lt.s32.totalorder %s180, 8
        %s186 = scalar_select %p185, %s180, 8
        %s187 = smul.addr %s186, 8
        %s188 = scalar_lea.vmem %s0, %s187
        %p189 = pneg %p37
        %p190 = pneg %p34
        %p191 = pneg %p58
        %p192 = pneg %p55
        %p193 = pneg %p79
        %p194 = pneg %p76
        %p195 = pneg %p105
        %p196 = pneg %p102
        %s197 = sand.u32 %s92, 1
        %s198 = sand.u32 %s92, 1
        %s199 = smul.addr %s198, 64
        %s200 = scalar_lea.vmem [#allocation2], %s199
        %p201 = pneg %p131
        %p202 = pneg %p128
        %s203 = sand.u32 %s118, 1
        %s204 = sand.u32 %s118, 1
        %s205 = smul.addr %s204, 64
        %s206 = scalar_lea.vmem [#allocation3], %s205
        %s207 = smul.u32 8, %s16
        %s208 = ssub.s32 9, %s207
        %p209 = scmp.lt.s32.totalorder %s208, 8
        %s210 = scalar_select %p209, %s208, 8
        %s211 = smul.u32 8, %s210
        %p212 = scmp.lt.s32.totalorder %s207, 8
        %s213 = scalar_select %p212, %s207, 8
        %s214 = smul.addr %s213, 8
        %s215 = scalar_lea.vmem %s0, %s214
        %s216 = smul.u32 8, %s16
        %s217 = ssub.s32 9, %s216
        %p218 = scmp.lt.s32.totalorder %s217, 8
        %s219 = scalar_select %p218, %s217, 8
        %s220 = smul.u32 8, %s219
        %s221 = smul.u32 8, %s16
        %s222 = ssub.s32 9, %s221
        %p223 = scmp.lt.s32.totalorder %s222, 8
        %s224 = scalar_select %p223, %s222, 8
        %s225 = smul.u32 8, %s224
        %s226 = smul.u32 8, %s16
        %s227 = ssub.s32 9, %s226
        %p228 = scmp.lt.s32.totalorder %s227, 8
        %s229 = scalar_select %p228, %s227, 8
        %s230 = smul.u32 8, %s229
        %v231 = vld [vmem:[%s215] sm:$0xff]
        %v232 = vld [vmem:[%s215 + $0x8] sm:$0xff]
        %v233 = vld [vmem:[%s215 + $0x10] sm:$0xff]
        %v234 = vld [vmem:[%s215 + $0x18] sm:$0xff]
        %v235 = vld [vmem:[%s215 + $0x20] sm:$0xff]
        %v236 = vld [vmem:[%s215 + $0x28] sm:$0xff]
        %v237 = vld [vmem:[%s215 + $0x30] sm:$0xff]
        %v238 = vld [vmem:[%s215 + $0x38] sm:$0xff]
        %v239 = vld [vmem:[%s1] sm:$0xff]
        %v240 = vld [vmem:[%s1 + $0x8] sm:$0xff]
        %v241 = vld [vmem:[%s1 + $0x10] sm:$0xff]
        %v242 = vld [vmem:[%s1 + $0x18] sm:$0xff]
        %v243 = vld [vmem:[%s1 + $0x20] sm:$0xff]
        %v244 = vld [vmem:[%s1 + $0x28] sm:$0xff]
        %vm245 = vcmask 392192
        %v247 = vsel %vm245, %v231, 0
        %v250 = vsel %vm245, %v232, 0
        %v253 = vsel %vm245, %v233, 0
        %v256 = vsel %vm245, %v234, 0
        %v259 = vsel %vm245, %v235, 0
        %v262 = vsel %vm245, %v236, 0
        %v265 = vsel %vm245, %v237, 0
        %v268 = vsel %vm245, %v238, 0
        %270 = vmatpush.msra.mxu0 0.0
        %271 = vmatpush.msra.mxu0 0.0
        %272 = vmatpush.msra.mxu0 0.0
        %273 = vmatpush.msra.mxu0 0.0
        %274 = vmatpush.msra.mxu0 0.0
        %275 = vmatpush.msra.mxu0 0.0
        %276 = vmatpush.msra.mxu0 0.0
        %277 = vmatpush.msra.mxu0 0.0
        %278 = vmatpush.msra.mxu0 0.0
        %279 = vmatpush.msra.mxu0 0.0
        %280 = vmatpush.msra.mxu0 %v244
        %281 = vmatpush.msra.mxu0 %v243
        %282 = vmatpush.msra.mxu0 %v242
        %283 = vmatpush.msra.mxu0 %v241
        %284 = vmatpush.msra.mxu0 %v240
        %285 = vmatpush.msra.mxu0 %v239
        %286 = vmatmul.f32.gmra.mxu0 %v247
        %v287 = vpop.f32.mrf.mxu0
        %v288 = vadd.f32 0.0, %v287
        %289 = vmatmul.f32.gmra.mxu0 %v250
        %v290 = vpop.f32.mrf.mxu0
        %v291 = vadd.f32 0.0, %v290
        %292 = vmatmul.f32.gmra.mxu0 %v253
        %v293 = vpop.f32.mrf.mxu0
        %v294 = vadd.f32 0.0, %v293
        %295 = vmatmul.f32.gmra.mxu0 %v256
        %v296 = vpop.f32.mrf.mxu0
        %v297 = vadd.f32 0.0, %v296
        %298 = vmatmul.f32.gmra.mxu0 %v259
        %v299 = vpop.f32.mrf.mxu0
        %v300 = vadd.f32 0.0, %v299
        %301 = vmatmul.f32.gmra.mxu0 %v262
        %v302 = vpop.f32.mrf.mxu0
        %v303 = vadd.f32 0.0, %v302
        %304 = vmatmul.f32.gmra.mxu0 %v265
        %v305 = vpop.f32.mrf.mxu0
        %v306 = vadd.f32 0.0, %v305
        %307 = vmatmul.f32.gmra.mxu0 %v268
        %v308 = vpop.f32.mrf.mxu0
        %v309 = vadd.f32 0.0, %v308
        %310 = vdwg.mxu0
        %vm311 = vcmask 31744
        %312 = vst.msk [vmem:[%s200] sm:$0xff] %vm311, %v288
        %313 = vst.msk [vmem:[%s200 + $0x8] sm:$0xff] %vm311, %v291
        %314 = vst.msk [vmem:[%s200 + $0x10] sm:$0xff] %vm311, %v294
        %315 = vst.msk [vmem:[%s200 + $0x18] sm:$0xff] %vm311, %v297
        %316 = vst.msk [vmem:[%s200 + $0x20] sm:$0xff] %vm311, %v300
        %317 = vst.msk [vmem:[%s200 + $0x28] sm:$0xff] %vm311, %v303
        %318 = vst.msk [vmem:[%s200 + $0x30] sm:$0xff] %vm311, %v306
        %319 = vst.msk [vmem:[%s200 + $0x38] sm:$0xff] %vm311, %v309
        %v320 = vld [vmem:[%s2] sm:$0xff]
        %v321 = vld [vmem:[%s2 + $0x8] sm:$0xff]
        %v322 = vld [vmem:[%s2 + $0x10] sm:$0xff]
        %v323 = vld [vmem:[%s2 + $0x18] sm:$0xff]
        %v324 = vld [vmem:[%s2 + $0x20] sm:$0xff]
        %v325 = vld [vmem:[%s2 + $0x28] sm:$0xff]
        %326 = vmatpush.msra.mxu0 0.0
        %327 = vmatpush.msra.mxu0 0.0
        %328 = vmatpush.msra.mxu0 0.0
        %329 = vmatpush.msra.mxu0 0.0
        %330 = vmatpush.msra.mxu0 0.0
        %331 = vmatpush.msra.mxu0 0.0
        %332 = vmatpush.msra.mxu0 0.0
        %333 = vmatpush.msra.mxu0 0.0
        %334 = vmatpush.msra.mxu0 0.0
        %335 = vmatpush.msra.mxu0 0.0
        %336 = vmatpush.msra.mxu0 %v325
        %337 = vmatpush.msra.mxu0 %v324
        %338 = vmatpush.msra.mxu0 %v323
        %339 = vmatpush.msra.mxu0 %v322
        %340 = vmatpush.msra.mxu0 %v321
        %341 = vmatpush.msra.mxu0 %v320
        %342 = vmatmul.f32.gmra.mxu0 %v247
        %v343 = vpop.f32.mrf.mxu0
        %v344 = vadd.f32 0.0, %v343
        %345 = vmatmul.f32.gmra.mxu0 %v250
        %v346 = vpop.f32.mrf.mxu0
        %v347 = vadd.f32 0.0, %v346
        %348 = vmatmul.f32.gmra.mxu0 %v253
        %v349 = vpop.f32.mrf.mxu0
        %v350 = vadd.f32 0.0, %v349
        %351 = vmatmul.f32.gmra.mxu0 %v256
        %v352 = vpop.f32.mrf.mxu0
        %v353 = vadd.f32 0.0, %v352
        %354 = vmatmul.f32.gmra.mxu0 %v259
        %v355 = vpop.f32.mrf.mxu0
        %v356 = vadd.f32 0.0, %v355
        %357 = vmatmul.f32.gmra.mxu0 %v262
        %v358 = vpop.f32.mrf.mxu0
        %v359 = vadd.f32 0.0, %v358
        %360 = vmatmul.f32.gmra.mxu0 %v265
        %v361 = vpop.f32.mrf.mxu0
        %v362 = vadd.f32 0.0, %v361
        %363 = vmatmul.f32.gmra.mxu0 %v268
        %v364 = vpop.f32.mrf.mxu0
        %v365 = vadd.f32 0.0, %v364
        %366 = vdwg.mxu0
        %vm367 = vcmask 130048
        %368 = vst.msk [vmem:[%s206] sm:$0xff] %vm367, %v344
        %369 = vst.msk [vmem:[%s206 + $0x8] sm:$0xff] %vm367, %v347
        %370 = vst.msk [vmem:[%s206 + $0x10] sm:$0xff] %vm367, %v350
        %371 = vst.msk [vmem:[%s206 + $0x18] sm:$0xff] %vm367, %v353
        %372 = vst.msk [vmem:[%s206 + $0x20] sm:$0xff] %vm367, %v356
        %373 = vst.msk [vmem:[%s206 + $0x28] sm:$0xff] %vm367, %v359
        %374 = vst.msk [vmem:[%s206 + $0x30] sm:$0xff] %vm367, %v362
        %375 = vst.msk [vmem:[%s206 + $0x38] sm:$0xff] %vm367, %v365
        %s376 = sand.u32 %s92, 1
        %s377 = sand.u32 %s92, 1
        %s378 = smul.addr %s377, 64
        %s379 = scalar_lea.vmem [#allocation2], %s378
        %s380 = sand.u32 %s118, 1
        %s381 = sand.u32 %s118, 1
        %s382 = smul.addr %s381, 64
        %s383 = scalar_lea.vmem [#allocation3], %s382
        // Predicated region
        $region33: #{tpu_custom_call.1} parent=31 // pred_check
          %p384 = pneg %p102
        $region34: #{tpu_custom_call.1} parent=31 // pred_check_branch
          %386 = sbr.rel (%p384) target = $region36
        $region35: #{tpu_custom_call.1} parent=31 // pred_region
          %s387 = smul.u32 8, %s16
          %s388 = ssub.s32 9, %s387
          %p389 = scmp.lt.s32.totalorder %s388, 8
          %s390 = scalar_select %p389, %s388, 8
          %s391 = smul.u32 8, %s390
          %p392 = scmp.ne.s32.totalorder 0, %s391
          %s393 = smul.addr %s387, 8
          %s394 = scalar_lea.vmem %s3, %s393
          // Predicated region
          $region37: #{tpu_custom_call.1} parent=35 // pred_check
            %p395 = pneg %p392
          $region38: #{tpu_custom_call.1} parent=35 // pred_check_branch
            %397 = sbr.rel (%p395) target = $region40
          $region39: #{tpu_custom_call.1} parent=35 // pred_region
            // Predicated region
            $region41: #{tpu_custom_call.1} parent=39 // pred_check
              _
            $region42: #{tpu_custom_call.1} parent=39 // pred_check_branch
              %399 = sbr.rel (0) target = $region44
            $region43: #{tpu_custom_call.1} parent=39 // pred_region
              // Predicated region
              $region63: #{tpu_custom_call.1} parent=43 // pred_check
                _
              $region64: #{tpu_custom_call.1} parent=43 // pred_check_branch
                %463 = sbr.rel (0) target = $region66
              $region65: #{tpu_custom_call.1} parent=43 // pred_region
                %s464 = sshrl.u32 %s390, 3
                // While loop
                $region67: #{tpu_custom_call.1} parent=65 // loop_pre_header
                  _
                $region68: #{tpu_custom_call.1} parent=65 // loop_header
                  %s466 = sphi 0, %s468
                  %p467 = scmp.ge.s32.totalorder %s466, %s464
                  %s471 = sphi 0, %s492
                  %s472 = sphi %s379, %s495
                  %s473 = sphi %s394, %s496
                $region69: #{tpu_custom_call.1} parent=65 // loop_header_branch
                  %470 = sbr.rel (%p467) target = $region73
                $region70: #{tpu_custom_call.1} parent=65 // loop_body
                  %v474 = vld [vmem:[%s472] sm:$0xff]
                  %475 = vst [vmem:[%s473] sm:$0xff] %v474
                  %v476 = vld [vmem:[%s472 + $0x8] sm:$0xff]
                  %477 = vst [vmem:[%s473 + $0x8] sm:$0xff] %v476
                  %v478 = vld [vmem:[%s472 + $0x10] sm:$0xff]
                  %479 = vst [vmem:[%s473 + $0x10] sm:$0xff] %v478
                  %v480 = vld [vmem:[%s472 + $0x18] sm:$0xff]
                  %481 = vst [vmem:[%s473 + $0x18] sm:$0xff] %v480
                  %v482 = vld [vmem:[%s472 + $0x20] sm:$0xff]
                  %483 = vst [vmem:[%s473 + $0x20] sm:$0xff] %v482
                  %v484 = vld [vmem:[%s472 + $0x28] sm:$0xff]
                  %485 = vst [vmem:[%s473 + $0x28] sm:$0xff] %v484
                  %v486 = vld [vmem:[%s472 + $0x30] sm:$0xff]
                  %487 = vst [vmem:[%s473 + $0x30] sm:$0xff] %v486
                  %v488 = vld [vmem:[%s472 + $0x38] sm:$0xff]
                  %489 = vst [vmem:[%s473 + $0x38] sm:$0xff] %v488
                  %s490 = sadd.s32 1, %s471
                  %p491 = scmp.ge.s32.totalorder %s490, %s464
                  %s492 = scalar_select %p491, 0, %s490
                  %s493 = smul.u32 %s492, 64
                  %s494 = smul.u32 %s492, 64
                  %s495 = scalar_lea.vmem %s379, %s493 [#allocation2]
                  %s496 = scalar_lea.vmem %s394, %s494
                $region71: #{tpu_custom_call.1} parent=65 // loop_footer
                  %s468 = sadd.s32 %s466, 1
                $region72: #{tpu_custom_call.1} parent=65 // loop_footer_branch
                  %465 = sbr.rel target = $region68
                $region73: #{tpu_custom_call.1} parent=65 // loop_exit
                  _
                %s497 = sshrl.u32 %s390, 3
                %s498 = sand.u32 %s390, 7
                %s499 = smul.u32 %s497, 8
                %s500 = smul.u32 8, %s499
                %s501 = scalar_lea.vmem %s379, %s500 [#allocation2]
                %s502 = smul.u32 8, %s499
                %s503 = scalar_lea.vmem %s394, %s502
                // While loop
                $region74: #{tpu_custom_call.1} parent=65 // loop_pre_header
                  _
                $region75: #{tpu_custom_call.1} parent=65 // loop_header
                  %s505 = sphi 0, %s507
                  %p506 = scmp.ge.s32.totalorder %s505, %s498
                  %s510 = sphi 0, %s517
                  %s511 = sphi %s501, %s520
                  %s512 = sphi %s503, %s521
                $region76: #{tpu_custom_call.1} parent=65 // loop_header_branch
                  %509 = sbr.rel (%p506) target = $region80
                $region77: #{tpu_custom_call.1} parent=65 // loop_body
                  %v513 = vld [vmem:[%s511] sm:$0xff]
                  %514 = vst [vmem:[%s512] sm:$0xff] %v513
                  %s515 = sadd.s32 1, %s510
                  %p516 = scmp.ge.s32.totalorder %s515, %s498
                  %s517 = scalar_select %p516, 0, %s515
                  %s518 = smul.u32 %s517, 8
                  %s519 = smul.u32 %s517, 8
                  %s520 = scalar_lea.vmem %s501, %s518 [#allocation2]
                  %s521 = scalar_lea.vmem %s503, %s519
                $region78: #{tpu_custom_call.1} parent=65 // loop_footer
                  %s507 = sadd.s32 %s505, 1
                $region79: #{tpu_custom_call.1} parent=65 // loop_footer_branch
                  %504 = sbr.rel target = $region75
                $region80: #{tpu_custom_call.1} parent=65 // loop_exit
                  _
              $region66: #{tpu_custom_call.1} parent=43 // pred_fallthru
                _
              // Predicated region
              $region81: #{tpu_custom_call.1} parent=43 // pred_check
                _
              $region82: #{tpu_custom_call.1} parent=43 // pred_check_branch
                %523 = sbr.rel target = $region84
              $region83: #{tpu_custom_call.1} parent=43 // pred_region
                _
              $region84: #{tpu_custom_call.1} parent=43 // pred_fallthru
                _
            $region44: #{tpu_custom_call.1} parent=39 // pred_fallthru
              _
            // Predicated region
            $region45: #{tpu_custom_call.1} parent=39 // pred_check
              _
            $region46: #{tpu_custom_call.1} parent=39 // pred_check_branch
              %401 = sbr.rel target = $region48
            $region47: #{tpu_custom_call.1} parent=39 // pred_region
              %s403 = ssub.s32 256, 1
              %s404 = sshrl.u32 %s390, 3
              // While loop
              $region49: #{tpu_custom_call.1} parent=47 // loop_pre_header
                _
              $region50: #{tpu_custom_call.1} parent=47 // loop_header
                %s406 = sphi 0, %s408
                %p407 = scmp.ge.s32.totalorder %s406, %s404
                %s411 = sphi 0, %s432
                %s412 = sphi %s379, %s435
                %s413 = sphi %s394, %s436
              $region51: #{tpu_custom_call.1} parent=47 // loop_header_branch
                %410 = sbr.rel (%p407) target = $region55
              $region52: #{tpu_custom_call.1} parent=47 // loop_body
                %v414 = vld [vmem:[%s412] sm:%s403]
                %415 = vst [vmem:[%s413] sm:%s403] %v414
                %v416 = vld [vmem:[%s412 + $0x8] sm:%s403]
                %417 = vst [vmem:[%s413 + $0x8] sm:%s403] %v416
                %v418 = vld [vmem:[%s412 + $0x10] sm:%s403]
                %419 = vst [vmem:[%s413 + $0x10] sm:%s403] %v418
                %v420 = vld [vmem:[%s412 + $0x18] sm:%s403]
                %421 = vst [vmem:[%s413 + $0x18] sm:%s403] %v420
                %v422 = vld [vmem:[%s412 + $0x20] sm:%s403]
                %423 = vst [vmem:[%s413 + $0x20] sm:%s403] %v422
                %v424 = vld [vmem:[%s412 + $0x28] sm:%s403]
                %425 = vst [vmem:[%s413 + $0x28] sm:%s403] %v424
                %v426 = vld [vmem:[%s412 + $0x30] sm:%s403]
                %427 = vst [vmem:[%s413 + $0x30] sm:%s403] %v426
                %v428 = vld [vmem:[%s412 + $0x38] sm:%s403]
                %429 = vst [vmem:[%s413 + $0x38] sm:%s403] %v428
                %s430 = sadd.s32 1, %s411
                %p431 = scmp.ge.s32.totalorder %s430, %s404
                %s432 = scalar_select %p431, 0, %s430
                %s433 = smul.u32 %s432, 64
                %s434 = smul.u32 %s432, 64
                %s435 = scalar_lea.vmem %s379, %s433 [#allocation2]
                %s436 = scalar_lea.vmem %s394, %s434
              $region53: #{tpu_custom_call.1} parent=47 // loop_footer
                %s408 = sadd.s32 %s406, 1
              $region54: #{tpu_custom_call.1} parent=47 // loop_footer_branch
                %405 = sbr.rel target = $region50
              $region55: #{tpu_custom_call.1} parent=47 // loop_exit
                _
              %s437 = sshrl.u32 %s390, 3
              %s438 = sand.u32 %s390, 7
              %s439 = smul.u32 %s437, 8
              %s440 = smul.u32 8, %s439
              %s441 = scalar_lea.vmem %s379, %s440 [#allocation2]
              %s442 = smul.u32 8, %s439
              %s443 = scalar_lea.vmem %s394, %s442
              // While loop
              $region56: #{tpu_custom_call.1} parent=47 // loop_pre_header
                _
              $region57: #{tpu_custom_call.1} parent=47 // loop_header
                %s445 = sphi 0, %s447
                %p446 = scmp.ge.s32.totalorder %s445, %s438
                %s450 = sphi 0, %s457
                %s451 = sphi %s441, %s460
                %s452 = sphi %s443, %s461
              $region58: #{tpu_custom_call.1} parent=47 // loop_header_branch
                %449 = sbr.rel (%p446) target = $region62
              $region59: #{tpu_custom_call.1} parent=47 // loop_body
                %v453 = vld [vmem:[%s451] sm:%s403]
                %454 = vst [vmem:[%s452] sm:%s403] %v453
                %s455 = sadd.s32 1, %s450
                %p456 = scmp.ge.s32.totalorder %s455, %s438
                %s457 = scalar_select %p456, 0, %s455
                %s458 = smul.u32 %s457, 8
                %s459 = smul.u32 %s457, 8
                %s460 = scalar_lea.vmem %s441, %s458 [#allocation2]
                %s461 = scalar_lea.vmem %s443, %s459
              $region60: #{tpu_custom_call.1} parent=47 // loop_footer
                %s447 = sadd.s32 %s445, 1
              $region61: #{tpu_custom_call.1} parent=47 // loop_footer_branch
                %444 = sbr.rel target = $region57
              $region62: #{tpu_custom_call.1} parent=47 // loop_exit
                _
            $region48: #{tpu_custom_call.1} parent=39 // pred_fallthru
              _
          $region40: #{tpu_custom_call.1} parent=35 // pred_fallthru
            _
          %524 = vnop
        $region36: #{tpu_custom_call.1} parent=31 // pred_fallthru
          _
        // Predicated region
        $region85: #{tpu_custom_call.1} parent=31 // pred_check
          %p525 = pneg %p128
        $region86: #{tpu_custom_call.1} parent=31 // pred_check_branch
          %527 = sbr.rel (%p525) target = $region88
        $region87: #{tpu_custom_call.1} parent=31 // pred_region
          %s528 = smul.u32 8, %s16
          %s529 = ssub.s32 9, %s528
          %p530 = scmp.lt.s32.totalorder %s529, 8
          %s531 = scalar_select %p530, %s529, 8
          %s532 = smul.u32 8, %s531
          %p533 = scmp.ne.s32.totalorder 0, %s532
          %s534 = smul.addr %s528, 8
          %s535 = scalar_lea.vmem %s4, %s534
          // Predicated region
          $region89: #{tpu_custom_call.1} parent=87 // pred_check
            %p536 = pneg %p533
          $region90: #{tpu_custom_call.1} parent=87 // pred_check_branch
            %538 = sbr.rel (%p536) target = $region92
          $region91: #{tpu_custom_call.1} parent=87 // pred_region
            // Predicated region
            $region93: #{tpu_custom_call.1} parent=91 // pred_check
              _
            $region94: #{tpu_custom_call.1} parent=91 // pred_check_branch
              %540 = sbr.rel (0) target = $region96
            $region95: #{tpu_custom_call.1} parent=91 // pred_region
              // Predicated region
              $region115: #{tpu_custom_call.1} parent=95 // pred_check
                _
              $region116: #{tpu_custom_call.1} parent=95 // pred_check_branch
                %604 = sbr.rel (0) target = $region118
              $region117: #{tpu_custom_call.1} parent=95 // pred_region
                %s605 = sshrl.u32 %s531, 3
                // While loop
                $region119: #{tpu_custom_call.1} parent=117 // loop_pre_header
                  _
                $region120: #{tpu_custom_call.1} parent=117 // loop_header
                  %s607 = sphi 0, %s609
                  %p608 = scmp.ge.s32.totalorder %s607, %s605
                  %s612 = sphi 0, %s633
                  %s613 = sphi %s383, %s636
                  %s614 = sphi %s535, %s637
                $region121: #{tpu_custom_call.1} parent=117 // loop_header_branch
                  %611 = sbr.rel (%p608) target = $region125
                $region122: #{tpu_custom_call.1} parent=117 // loop_body
                  %v615 = vld [vmem:[%s613] sm:$0xff]
                  %616 = vst [vmem:[%s614] sm:$0xff] %v615
                  %v617 = vld [vmem:[%s613 + $0x8] sm:$0xff]
                  %618 = vst [vmem:[%s614 + $0x8] sm:$0xff] %v617
                  %v619 = vld [vmem:[%s613 + $0x10] sm:$0xff]
                  %620 = vst [vmem:[%s614 + $0x10] sm:$0xff] %v619
                  %v621 = vld [vmem:[%s613 + $0x18] sm:$0xff]
                  %622 = vst [vmem:[%s614 + $0x18] sm:$0xff] %v621
                  %v623 = vld [vmem:[%s613 + $0x20] sm:$0xff]
                  %624 = vst [vmem:[%s614 + $0x20] sm:$0xff] %v623
                  %v625 = vld [vmem:[%s613 + $0x28] sm:$0xff]
                  %626 = vst [vmem:[%s614 + $0x28] sm:$0xff] %v625
                  %v627 = vld [vmem:[%s613 + $0x30] sm:$0xff]
                  %628 = vst [vmem:[%s614 + $0x30] sm:$0xff] %v627
                  %v629 = vld [vmem:[%s613 + $0x38] sm:$0xff]
                  %630 = vst [vmem:[%s614 + $0x38] sm:$0xff] %v629
                  %s631 = sadd.s32 1, %s612
                  %p632 = scmp.ge.s32.totalorder %s631, %s605
                  %s633 = scalar_select %p632, 0, %s631
                  %s634 = smul.u32 %s633, 64
                  %s635 = smul.u32 %s633, 64
                  %s636 = scalar_lea.vmem %s383, %s634 [#allocation3]
                  %s637 = scalar_lea.vmem %s535, %s635
                $region123: #{tpu_custom_call.1} parent=117 // loop_footer
                  %s609 = sadd.s32 %s607, 1
                $region124: #{tpu_custom_call.1} parent=117 // loop_footer_branch
                  %606 = sbr.rel target = $region120
                $region125: #{tpu_custom_call.1} parent=117 // loop_exit
                  _
                %s638 = sshrl.u32 %s531, 3
                %s639 = sand.u32 %s531, 7
                %s640 = smul.u32 %s638, 8
                %s641 = smul.u32 8, %s640
                %s642 = scalar_lea.vmem %s383, %s641 [#allocation3]
                %s643 = smul.u32 8, %s640
                %s644 = scalar_lea.vmem %s535, %s643
                // While loop
                $region126: #{tpu_custom_call.1} parent=117 // loop_pre_header
                  _
                $region127: #{tpu_custom_call.1} parent=117 // loop_header
                  %s646 = sphi 0, %s648
                  %p647 = scmp.ge.s32.totalorder %s646, %s639
                  %s651 = sphi 0, %s658
                  %s652 = sphi %s642, %s661
                  %s653 = sphi %s644, %s662
                $region128: #{tpu_custom_call.1} parent=117 // loop_header_branch
                  %650 = sbr.rel (%p647) target = $region132
                $region129: #{tpu_custom_call.1} parent=117 // loop_body
                  %v654 = vld [vmem:[%s652] sm:$0xff]
                  %655 = vst [vmem:[%s653] sm:$0xff] %v654
                  %s656 = sadd.s32 1, %s651
                  %p657 = scmp.ge.s32.totalorder %s656, %s639
                  %s658 = scalar_select %p657, 0, %s656
                  %s659 = smul.u32 %s658, 8
                  %s660 = smul.u32 %s658, 8
                  %s661 = scalar_lea.vmem %s642, %s659 [#allocation3]
                  %s662 = scalar_lea.vmem %s644, %s660
                $region130: #{tpu_custom_call.1} parent=117 // loop_footer
                  %s648 = sadd.s32 %s646, 1
                $region131: #{tpu_custom_call.1} parent=117 // loop_footer_branch
                  %645 = sbr.rel target = $region127
                $region132: #{tpu_custom_call.1} parent=117 // loop_exit
                  _
              $region118: #{tpu_custom_call.1} parent=95 // pred_fallthru
                _
              // Predicated region
              $region133: #{tpu_custom_call.1} parent=95 // pred_check
                _
              $region134: #{tpu_custom_call.1} parent=95 // pred_check_branch
                %664 = sbr.rel target = $region136
              $region135: #{tpu_custom_call.1} parent=95 // pred_region
                _
              $region136: #{tpu_custom_call.1} parent=95 // pred_fallthru
                _
            $region96: #{tpu_custom_call.1} parent=91 // pred_fallthru
              _
            // Predicated region
            $region97: #{tpu_custom_call.1} parent=91 // pred_check
              _
            $region98: #{tpu_custom_call.1} parent=91 // pred_check_branch
              %542 = sbr.rel target = $region100
            $region99: #{tpu_custom_call.1} parent=91 // pred_region
              %s544 = ssub.s32 256, 1
              %s545 = sshrl.u32 %s531, 3
              // While loop
              $region101: #{tpu_custom_call.1} parent=99 // loop_pre_header
                _
              $region102: #{tpu_custom_call.1} parent=99 // loop_header
                %s547 = sphi 0, %s549
                %p548 = scmp.ge.s32.totalorder %s547, %s545
                %s552 = sphi 0, %s573
                %s553 = sphi %s383, %s576
                %s554 = sphi %s535, %s577
              $region103: #{tpu_custom_call.1} parent=99 // loop_header_branch
                %551 = sbr.rel (%p548) target = $region107
              $region104: #{tpu_custom_call.1} parent=99 // loop_body
                %v555 = vld [vmem:[%s553] sm:%s544]
                %556 = vst [vmem:[%s554] sm:%s544] %v555
                %v557 = vld [vmem:[%s553 + $0x8] sm:%s544]
                %558 = vst [vmem:[%s554 + $0x8] sm:%s544] %v557
                %v559 = vld [vmem:[%s553 + $0x10] sm:%s544]
                %560 = vst [vmem:[%s554 + $0x10] sm:%s544] %v559
                %v561 = vld [vmem:[%s553 + $0x18] sm:%s544]
                %562 = vst [vmem:[%s554 + $0x18] sm:%s544] %v561
                %v563 = vld [vmem:[%s553 + $0x20] sm:%s544]
                %564 = vst [vmem:[%s554 + $0x20] sm:%s544] %v563
                %v565 = vld [vmem:[%s553 + $0x28] sm:%s544]
                %566 = vst [vmem:[%s554 + $0x28] sm:%s544] %v565
                %v567 = vld [vmem:[%s553 + $0x30] sm:%s544]
                %568 = vst [vmem:[%s554 + $0x30] sm:%s544] %v567
                %v569 = vld [vmem:[%s553 + $0x38] sm:%s544]
                %570 = vst [vmem:[%s554 + $0x38] sm:%s544] %v569
                %s571 = sadd.s32 1, %s552
                %p572 = scmp.ge.s32.totalorder %s571, %s545
                %s573 = scalar_select %p572, 0, %s571
                %s574 = smul.u32 %s573, 64
                %s575 = smul.u32 %s573, 64
                %s576 = scalar_lea.vmem %s383, %s574 [#allocation3]
                %s577 = scalar_lea.vmem %s535, %s575
              $region105: #{tpu_custom_call.1} parent=99 // loop_footer
                %s549 = sadd.s32 %s547, 1
              $region106: #{tpu_custom_call.1} parent=99 // loop_footer_branch
                %546 = sbr.rel target = $region102
              $region107: #{tpu_custom_call.1} parent=99 // loop_exit
                _
              %s578 = sshrl.u32 %s531, 3
              %s579 = sand.u32 %s531, 7
              %s580 = smul.u32 %s578, 8
              %s581 = smul.u32 8, %s580
              %s582 = scalar_lea.vmem %s383, %s581 [#allocation3]
              %s583 = smul.u32 8, %s580
              %s584 = scalar_lea.vmem %s535, %s583
              // While loop
              $region108: #{tpu_custom_call.1} parent=99 // loop_pre_header
                _
              $region109: #{tpu_custom_call.1} parent=99 // loop_header
                %s586 = sphi 0, %s588
                %p587 = scmp.ge.s32.totalorder %s586, %s579
                %s591 = sphi 0, %s598
                %s592 = sphi %s582, %s601
                %s593 = sphi %s584, %s602
              $region110: #{tpu_custom_call.1} parent=99 // loop_header_branch
                %590 = sbr.rel (%p587) target = $region114
              $region111: #{tpu_custom_call.1} parent=99 // loop_body
                %v594 = vld [vmem:[%s592] sm:%s544]
                %595 = vst [vmem:[%s593] sm:%s544] %v594
                %s596 = sadd.s32 1, %s591
                %p597 = scmp.ge.s32.totalorder %s596, %s579
                %s598 = scalar_select %p597, 0, %s596
                %s599 = smul.u32 %s598, 8
                %s600 = smul.u32 %s598, 8
                %s601 = scalar_lea.vmem %s582, %s599 [#allocation3]
                %s602 = scalar_lea.vmem %s584, %s600
              $region112: #{tpu_custom_call.1} parent=99 // loop_footer
                %s588 = sadd.s32 %s586, 1
              $region113: #{tpu_custom_call.1} parent=99 // loop_footer_branch
                %585 = sbr.rel target = $region109
              $region114: #{tpu_custom_call.1} parent=99 // loop_exit
                _
            $region100: #{tpu_custom_call.1} parent=91 // pred_fallthru
              _
          $region92: #{tpu_custom_call.1} parent=87 // pred_fallthru
            _
          %665 = vnop
        $region88: #{tpu_custom_call.1} parent=31 // pred_fallthru
          _
      $region32: #{tpu_custom_call.1} parent=5 // pred_fallthru
        _
      %p666 = scmp.le.s32.totalorder 2, %s11
      // Predicated region
      $region137: #{tpu_custom_call.1} parent=5 // pred_check
        %p667 = pneg %p666
      $region138: #{tpu_custom_call.1} parent=5 // pred_check_branch
        %669 = sbr.rel (%p667) target = $region140
      $region139: #{tpu_custom_call.1} parent=5 // pred_region
        %s670 = ssub.s32 %s11, 2
        // Predicated region
        $region141: #{tpu_custom_call.1} parent=139 // pred_check
          %p671 = pneg %p108
        $region142: #{tpu_custom_call.1} parent=139 // pred_check_branch
          %673 = sbr.rel (%p671) target = $region144
        $region143: #{tpu_custom_call.1} parent=139 // pred_region
          %s674 = sand.u32 %s93, 1
          %s675 = sand.u32 %s93, 1
          %s676 = smul.addr %s675, 64
          %s677 = scalar_lea.vmem [#allocation2], %s676
        $region144: #{tpu_custom_call.1} parent=139 // pred_fallthru
          _
        // Predicated region
        $region145: #{tpu_custom_call.1} parent=139 // pred_check
          %p678 = pneg %p134
        $region146: #{tpu_custom_call.1} parent=139 // pred_check_branch
          %680 = sbr.rel (%p678) target = $region148
        $region147: #{tpu_custom_call.1} parent=139 // pred_region
          %s681 = sand.u32 %s119, 1
          %s682 = sand.u32 %s119, 1
          %s683 = smul.addr %s682, 64
          %s684 = scalar_lea.vmem [#allocation3], %s683
        $region148: #{tpu_custom_call.1} parent=139 // pred_fallthru
          _
      $region140: #{tpu_custom_call.1} parent=5 // pred_fallthru
        _
    $region6: #{tpu_custom_call.1} parent=1 // loop_footer
      %s15 = sadd.s32 1, %s11
    $region7: #{tpu_custom_call.1} parent=1 // loop_footer_branch
      %10 = sbr.rel target = $region3
    $region8: #{tpu_custom_call.1} parent=1 // loop_exit
      _

// kernel: tpu_custom_call.1
$region0: #{tpu_custom_call.1}
  #allocation0 [shape = 'u32[]', space=smem, size = 0x4, offset = 0x4, fixed_abs, tag = 'smem constant byte address 0x4 - core index']
  #allocation1 [shape = 'u32[72,128]{1,0:T(1,128)}', space=vmem, size = 0x9000, scoped, tag = 'internal scratch']
  %s0 = inlined_call_operand.vmem [shape: f32[72,48], index: 0, kind: input, shape index: {}]
  %s1 = inlined_call_operand.vmem [shape: f32[48,4], index: 1, kind: input, shape index: {}]
  %s2 = inlined_call_operand.vmem [shape: f32[48,16], index: 2, kind: input, shape index: {}]
  %s3 = inlined_call_operand.vmem [shape: f32[72,4], index: 3, kind: output, shape index: {0}]
  %s4 = inlined_call_operand.vmem [shape: f32[72,16], index: 4, kind: output, shape index: {1}]
  %5 = xla_tuple %s3, %s4
  %s6 = sld [smem:[#allocation0]]
  $region149: #{tpu_custom_call.1} parent=0
    _
  %s8 = ssub.s32 1, %s6
  %s9 = scalar_select 0, %s8, %s6
  $region1: #{tpu_custom_call.1} parent=0
    #allocation2 [shape = 'u8[65536]{0}', space=vmem, size = 0x10000, scoped, tag = 'output window, operand 0']
    #allocation3 [shape = 'u8[65536]{0}', space=vmem, size = 0x10000, scoped, tag = 'output window, operand 1']
    loop: start=0, step=1, limit=4
    $region2: #{tpu_custom_call.1} parent=1 // loop_pre_header
      _
    $region3: #{tpu_custom_call.1} parent=1 // loop_header
      %s11 = sphi 0, %s15
      %p12 = scmp.ge.s32.totalorder %s11, 4
      %s21 = sphi 0, %s23
      %s24 = sphi 0, %s21
      %s25 = sphi 0, %s24
      %s41 = sphi 0, %s25
      %s45 = sphi 0, %s45
      %s47 = sphi 0, %s45
      %s48 = sphi 0, %s47
      %s62 = sphi 0, %s48
      %s66 = sphi 0, %s66
      %s68 = sphi 0, %s66
      %s69 = sphi 0, %s68
      %s83 = sphi 0, %s69
      %s89 = sphi 0, %s91
      %s92 = sphi 0, %s89
      %s93 = sphi 0, %s92
      %s109 = sphi 0, %s93
      %s115 = sphi 0, %s117
      %s118 = sphi 0, %s115
      %s119 = sphi 0, %s118
      %s135 = sphi 0, %s119
    $region4: #{tpu_custom_call.1} parent=1 // loop_header_branch
      %14 = sbr.rel (%p12) target = $region8
    $region5: #{tpu_custom_call.1} parent=1 // loop_body
      %s16 = ssub.s32 %s11, 1
      %s17 = ssub.s32 %s11, 2
      %s18 = sadd.s32 %s11, 1
      %s19 = ssub.s32 %s11, %s18
      %p20 = scmp.eq.s32.totalorder %s19, 0
      %s22 = sadd.s32 %s21, 1
      %s23 = scalar_select %p20, %s21, %s22
      %p26 = pneg %p20
      %p27 = scmp.eq.s32.totalorder %s11, 1
      %p28 = por %p26, %p27
      %p29 = scmp.ne.s32.totalorder %s21, %s24
      %p30 = scmp.eq.s32.totalorder %s11, 0
      %p31 = por %p29, %p30
      %p32 = scmp.ne.s32.totalorder %s21, %s24
      %p33 = scmp.eq.s32.totalorder %s16, 1
      %p34 = por %p32, %p33
      %p35 = scmp.ne.s32.totalorder %s24, %s25
      %p36 = scmp.eq.s32.totalorder %s16, 0
      %p37 = por %p35, %p36
      %p38 = scmp.ne.s32.totalorder %s24, %s25
      %p39 = scmp.eq.s32.totalorder %s17, 1
      %p40 = por %p38, %p39
      %p42 = scmp.ne.s32.totalorder %s25, %s41
      %p43 = scmp.eq.s32.totalorder %s17, 0
      %p44 = por %p42, %p43
      %s46 = sadd.s32 %s45, 1
      %p49 = scmp.eq.s32.totalorder %s11, 1
      %p50 = scmp.ne.s32.totalorder %s45, %s47
      %p51 = scmp.eq.s32.totalorder %s11, 0
      %p52 = por %p50, %p51
      %p53 = scmp.ne.s32.totalorder %s45, %s47
      %p54 = scmp.eq.s32.totalorder %s16, 1
      %p55 = por %p53, %p54
      %p56 = scmp.ne.s32.totalorder %s47, %s48
      %p57 = scmp.eq.s32.totalorder %s16, 0
      %p58 = por %p56, %p57
      %p59 = scmp.ne.s32.totalorder %s47, %s48
      %p60 = scmp.eq.s32.totalorder %s17, 1
      %p61 = por %p59, %p60
      %p63 = scmp.ne.s32.totalorder %s48, %s62
      %p64 = scmp.eq.s32.totalorder %s17, 0
      %p65 = por %p63, %p64
      %s67 = sadd.s32 %s66, 1
      %p70 = scmp.eq.s32.totalorder %s11, 1
      %p71 = scmp.ne.s32.totalorder %s66, %s68
      %p72 = scmp.eq.s32.totalorder %s11, 0
      %p73 = por %p71, %p72
      %p74 = scmp.ne.s32.totalorder %s66, %s68
      %p75 = scmp.eq.s32.totalorder %s16, 1
      %p76 = por %p74, %p75
      %p77 = scmp.ne.s32.totalorder %s68, %s69
      %p78 = scmp.eq.s32.totalorder %s16, 0
      %p79 = por %p77, %p78
      %p80 = scmp.ne.s32.totalorder %s68, %s69
      %p81 = scmp.eq.s32.totalorder %s17, 1
      %p82 = por %p80, %p81
      %p84 = scmp.ne.s32.totalorder %s69, %s83
      %p85 = scmp.eq.s32.totalorder %s17, 0
      %p86 = por %p84, %p85
      %s87 = ssub.s32 %s11, %s18
      %p88 = scmp.eq.s32.totalorder %s87, 0
      %s90 = sadd.s32 %s89, 1
      %s91 = scalar_select %p88, %s89, %s90
      %p94 = pneg %p88
      %p95 = scmp.eq.s32.totalorder %s11, 1
      %p96 = por %p94, %p95
      %p97 = scmp.ne.s32.totalorder %s89, %s92
      %p98 = scmp.eq.s32.totalorder %s11, 0
      %p99 = por %p97, %p98
      %p100 = scmp.ne.s32.totalorder %s89, %s92
      %p101 = scmp.eq.s32.totalorder %s16, 1
      %p102 = por %p100, %p101
      %p103 = scmp.ne.s32.totalorder %s92, %s93
      %p104 = scmp.eq.s32.totalorder %s16, 0
      %p105 = por %p103, %p104
      %p106 = scmp.ne.s32.totalorder %s92, %s93
      %p107 = scmp.eq.s32.totalorder %s17, 1
      %p108 = por %p106, %p107
      %p110 = scmp.ne.s32.totalorder %s93, %s109
      %p111 = scmp.eq.s32.totalorder %s17, 0
      %p112 = por %p110, %p111
      %s113 = ssub.s32 %s11, %s18
      %p114 = scmp.eq.s32.totalorder %s113, 0
      %s116 = sadd.s32 %s115, 1
      %s117 = scalar_select %p114, %s115, %s116
      %p120 = pneg %p114
      %p121 = scmp.eq.s32.totalorder %s11, 1
      %p122 = por %p120, %p121
      %p123 = scmp.ne.s32.totalorder %s115, %s118
      %p124 = scmp.eq.s32.totalorder %s11, 0
      %p125 = por %p123, %p124
      %p126 = scmp.ne.s32.totalorder %s115, %s118
      %p127 = scmp.eq.s32.totalorder %s16, 1
      %p128 = por %p126, %p127
      %p129 = scmp.ne.s32.totalorder %s118, %s119
      %p130 = scmp.eq.s32.totalorder %s16, 0
      %p131 = por %p129, %p130
      %p132 = scmp.ne.s32.totalorder %s118, %s119
      %p133 = scmp.eq.s32.totalorder %s17, 1
      %p134 = por %p132, %p133
      %p136 = scmp.ne.s32.totalorder %s119, %s135
      %p137 = scmp.eq.s32.totalorder %s17, 0
      %p138 = por %p136, %p137
      %p139 = scmp.le.s32.totalorder 1, %s11
      %p140 = scmp.lt.s32.totalorder %s11, 3
      %p141 = pnand %p139, %p140
      %p142 = pneg %p141
      // Predicated region
      $region9: #{tpu_custom_call.1} parent=5 // pred_check
        _
      $region10: #{tpu_custom_call.1} parent=5 // pred_check_branch
        %144 = sbr.rel (%p141) target = $region12
      $region11: #{tpu_custom_call.1} parent=5 // pred_region
        %s145 = ssub.s32 %s11, 1
        // Predicated region
        $region13: #{tpu_custom_call.1} parent=11 // pred_check
          %p146 = pneg %p58
        $region14: #{tpu_custom_call.1} parent=11 // pred_check_branch
          %148 = sbr.rel (%p146) target = $region16
        $region15: #{tpu_custom_call.1} parent=11 // pred_region
          _
        $region16: #{tpu_custom_call.1} parent=11 // pred_fallthru
          _
        // Predicated region
        $region17: #{tpu_custom_call.1} parent=11 // pred_check
          %p149 = pneg %p79
        $region18: #{tpu_custom_call.1} parent=11 // pred_check_branch
          %151 = sbr.rel (%p149) target = $region20
        $region19: #{tpu_custom_call.1} parent=11 // pred_region
          _
        $region20: #{tpu_custom_call.1} parent=11 // pred_fallthru
          _
      $region12: #{tpu_custom_call.1} parent=5 // pred_fallthru
        _
      %p152 = scmp.lt.s32.totalorder %s11, 2
      // Predicated region
      $region21: #{tpu_custom_call.1} parent=5 // pred_check
        %p153 = pneg %p152
      $region22: #{tpu_custom_call.1} parent=5 // pred_check_branch
        %155 = sbr.rel (%p153) target = $region24
      $region23: #{tpu_custom_call.1} parent=5 // pred_region
        // Predicated region
        $region25: #{tpu_custom_call.1} parent=23 // pred_check
          %p156 = pneg %p31
        $region26: #{tpu_custom_call.1} parent=23 // pred_check_branch
          %158 = sbr.rel (%p156) target = $region28
        $region27: #{tpu_custom_call.1} parent=23 // pred_region
          %s159 = smul.u32 8, %s11
          %s160 = ssub.s32 9, %s159
          %p161 = scmp.lt.s32.totalorder %s160, 8
          %s162 = scalar_select %p161, %s160, 8
          %s163 = smul.u32 8, %s162
          %p164 = scmp.lt.s32.totalorder %s159, 8
          %s165 = scalar_select %p164, %s159, 8
          %s166 = smul.addr %s165, 8
          %s167 = scalar_lea.vmem %s0, %s166
          %s168 = smul.u32 8, %s11
          %s169 = ssub.s32 9, %s168
          %p170 = scmp.lt.s32.totalorder %s169, 8
          %s171 = scalar_select %p170, %s169, 8
          %s172 = smul.u32 8, %s171
        $region28: #{tpu_custom_call.1} parent=23 // pred_fallthru
          _
      $region24: #{tpu_custom_call.1} parent=5 // pred_fallthru
        _
      %p173 = scmp.le.s32.totalorder 1, %s11
      %p174 = scmp.lt.s32.totalorder %s11, 3
      %p175 = pnand %p173, %p174
      %p176 = pneg %p175
      // Predicated region
      $region29: #{tpu_custom_call.1} parent=5 // pred_check
        _
      $region30: #{tpu_custom_call.1} parent=5 // pred_check_branch
        %178 = sbr.rel (%p175) target = $region32
      $region31: #{tpu_custom_call.1} parent=5 // pred_region
        %s179 = ssub.s32 %s11, 1
        %s180 = smul.u32 8, %s16
        %s181 = ssub.s32 9, %s180
        %p182 = scmp.lt.s32.totalorder %s181, 8
        %s183 = scalar_select %p182, %s181, 8
        %s184 = smul.u32 8, %s183
        %p185 = scmp.lt.s32.totalorder %s180, 8
        %s186 = scalar_select %p185, %s180, 8
        %s187 = smul.addr %s186, 8
        %s188 = scalar_lea.vmem %s0, %s187
        %p189 = pneg %p37
        %p190 = pneg %p34
        %p191 = pneg %p58
        %p192 = pneg %p55
        %p193 = pneg %p79
        %p194 = pneg %p76
        %p195 = pneg %p105
        %p196 = pneg %p102
        %s197 = sand.u32 %s92, 1
        %s198 = sand.u32 %s92, 1
        %s199 = smul.addr %s198, 64
        %s200 = scalar_lea.vmem [#allocation2], %s199
        %p201 = pneg %p131
        %p202 = pneg %p128
        %s203 = sand.u32 %s118, 1
        %s204 = sand.u32 %s118, 1
        %s205 = smul.addr %s204, 64
        %s206 = scalar_lea.vmem [#allocation3], %s205
        %s207 = smul.u32 8, %s16
        %s208 = ssub.s32 9, %s207
        %p209 = scmp.lt.s32.totalorder %s208, 8
        %s210 = scalar_select %p209, %s208, 8
        %s211 = smul.u32 8, %s210
        %p212 = scmp.lt.s32.totalorder %s207, 8
        %s213 = scalar_select %p212, %s207, 8
        %s214 = smul.addr %s213, 8
        %s215 = scalar_lea.vmem %s0, %s214
        %s216 = smul.u32 8, %s16
        %s217 = ssub.s32 9, %s216
        %p218 = scmp.lt.s32.totalorder %s217, 8
        %s219 = scalar_select %p218, %s217, 8
        %s220 = smul.u32 8, %s219
        %s221 = smul.u32 8, %s16
        %s222 = ssub.s32 9, %s221
        %p223 = scmp.lt.s32.totalorder %s222, 8
        %s224 = scalar_select %p223, %s222, 8
        %s225 = smul.u32 8, %s224
        %s226 = smul.u32 8, %s16
        %s227 = ssub.s32 9, %s226
        %p228 = scmp.lt.s32.totalorder %s227, 8
        %s229 = scalar_select %p228, %s227, 8
        %s230 = smul.u32 8, %s229
        %v231 = vld [vmem:[%s215] sm:$0xff]
        %v232 = vld [vmem:[%s215 + $0x8] sm:$0xff]
        %v233 = vld [vmem:[%s215 + $0x10] sm:$0xff]
        %v234 = vld [vmem:[%s215 + $0x18] sm:$0xff]
        %v235 = vld [vmem:[%s215 + $0x20] sm:$0xff]
        %v236 = vld [vmem:[%s215 + $0x28] sm:$0xff]
        %v237 = vld [vmem:[%s215 + $0x30] sm:$0xff]
        %v238 = vld [vmem:[%s215 + $0x38] sm:$0xff]
        %v239 = vld [vmem:[%s1] sm:$0xff]
        %v240 = vld [vmem:[%s1 + $0x8] sm:$0xff]
        %v241 = vld [vmem:[%s1 + $0x10] sm:$0xff]
        %v242 = vld [vmem:[%s1 + $0x18] sm:$0xff]
        %v243 = vld [vmem:[%s1 + $0x20] sm:$0xff]
        %v244 = vld [vmem:[%s1 + $0x28] sm:$0xff]
        %vm245 = vcmask 392192
        %v247 = vsel %vm245, %v231, 0
        %v250 = vsel %vm245, %v232, 0
        %v253 = vsel %vm245, %v233, 0
        %v256 = vsel %vm245, %v234, 0
        %v259 = vsel %vm245, %v235, 0
        %v262 = vsel %vm245, %v236, 0
        %v265 = vsel %vm245, %v237, 0
        %v268 = vsel %vm245, %v238, 0
        %270 = vmatpush.msra.mxu0 0.0
        %271 = vmatpush.msra.mxu0 0.0
        %272 = vmatpush.msra.mxu0 0.0
        %273 = vmatpush.msra.mxu0 0.0
        %274 = vmatpush.msra.mxu0 0.0
        %275 = vmatpush.msra.mxu0 0.0
        %276 = vmatpush.msra.mxu0 0.0
        %277 = vmatpush.msra.mxu0 0.0
        %278 = vmatpush.msra.mxu0 0.0
        %279 = vmatpush.msra.mxu0 0.0
        %280 = vmatpush.msra.mxu0 %v244
        %281 = vmatpush.msra.mxu0 %v243
        %282 = vmatpush.msra.mxu0 %v242
        %283 = vmatpush.msra.mxu0 %v241
        %284 = vmatpush.msra.mxu0 %v240
        %285 = vmatpush.msra.mxu0 %v239
        %286 = vmatmul.f32.gmra.mxu0 %v247
        %v287 = vpop.f32.mrf.mxu0
        %v288 = vadd.f32 0.0, %v287
        %289 = vmatmul.f32.gmra.mxu0 %v250
        %v290 = vpop.f32.mrf.mxu0
        %v291 = vadd.f32 0.0, %v290
        %292 = vmatmul.f32.gmra.mxu0 %v253
        %v293 = vpop.f32.mrf.mxu0
        %v294 = vadd.f32 0.0, %v293
        %295 = vmatmul.f32.gmra.mxu0 %v256
        %v296 = vpop.f32.mrf.mxu0
        %v297 = vadd.f32 0.0, %v296
        %298 = vmatmul.f32.gmra.mxu0 %v259
        %v299 = vpop.f32.mrf.mxu0
        %v300 = vadd.f32 0.0, %v299
        %301 = vmatmul.f32.gmra.mxu0 %v262
        %v302 = vpop.f32.mrf.mxu0
        %v303 = vadd.f32 0.0, %v302
        %304 = vmatmul.f32.gmra.mxu0 %v265
        %v305 = vpop.f32.mrf.mxu0
        %v306 = vadd.f32 0.0, %v305
        %307 = vmatmul.f32.gmra.mxu0 %v268
        %v308 = vpop.f32.mrf.mxu0
        %v309 = vadd.f32 0.0, %v308
        %310 = vdwg.mxu0
        %vm311 = vcmask 31744
        %312 = vst.msk [vmem:[%s200] sm:$0xff] %vm311, %v288
        %313 = vst.msk [vmem:[%s200 + $0x8] sm:$0xff] %vm311, %v291
        %314 = vst.msk [vmem:[%s200 + $0x10] sm:$0xff] %vm311, %v294
        %315 = vst.msk [vmem:[%s200 + $0x18] sm:$0xff] %vm311, %v297
        %316 = vst.msk [vmem:[%s200 + $0x20] sm:$0xff] %vm311, %v300
        %317 = vst.msk [vmem:[%s200 + $0x28] sm:$0xff] %vm311, %v303
        %318 = vst.msk [vmem:[%s200 + $0x30] sm:$0xff] %vm311, %v306
        %319 = vst.msk [vmem:[%s200 + $0x38] sm:$0xff] %vm311, %v309
        %v320 = vld [vmem:[%s2] sm:$0xff]
        %v321 = vld [vmem:[%s2 + $0x8] sm:$0xff]
        %v322 = vld [vmem:[%s2 + $0x10] sm:$0xff]
        %v323 = vld [vmem:[%s2 + $0x18] sm:$0xff]
        %v324 = vld [vmem:[%s2 + $0x20] sm:$0xff]
        %v325 = vld [vmem:[%s2 + $0x28] sm:$0xff]
        %326 = vmatpush.msra.mxu0 0.0
        %327 = vmatpush.msra.mxu0 0.0
        %328 = vmatpush.msra.mxu0 0.0
        %329 = vmatpush.msra.mxu0 0.0
        %330 = vmatpush.msra.mxu0 0.0
        %331 = vmatpush.msra.mxu0 0.0
        %332 = vmatpush.msra.mxu0 0.0
        %333 = vmatpush.msra.mxu0 0.0
        %334 = vmatpush.msra.mxu0 0.0
        %335 = vmatpush.msra.mxu0 0.0
        %336 = vmatpush.msra.mxu0 %v325
        %337 = vmatpush.msra.mxu0 %v324
        %338 = vmatpush.msra.mxu0 %v323
        %339 = vmatpush.msra.mxu0 %v322
        %340 = vmatpush.msra.mxu0 %v321
        %341 = vmatpush.msra.mxu0 %v320
        %342 = vmatmul.f32.gmra.mxu0 %v247
        %v343 = vpop.f32.mrf.mxu0
        %v344 = vadd.f32 0.0, %v343
        %345 = vmatmul.f32.gmra.mxu0 %v250
        %v346 = vpop.f32.mrf.mxu0
        %v347 = vadd.f32 0.0, %v346
        %348 = vmatmul.f32.gmra.mxu0 %v253
        %v349 = vpop.f32.mrf.mxu0
        %v350 = vadd.f32 0.0, %v349
        %351 = vmatmul.f32.gmra.mxu0 %v256
        %v352 = vpop.f32.mrf.mxu0
        %v353 = vadd.f32 0.0, %v352
        %354 = vmatmul.f32.gmra.mxu0 %v259
        %v355 = vpop.f32.mrf.mxu0
        %v356 = vadd.f32 0.0, %v355
        %357 = vmatmul.f32.gmra.mxu0 %v262
        %v358 = vpop.f32.mrf.mxu0
        %v359 = vadd.f32 0.0, %v358
        %360 = vmatmul.f32.gmra.mxu0 %v265
        %v361 = vpop.f32.mrf.mxu0
        %v362 = vadd.f32 0.0, %v361
        %363 = vmatmul.f32.gmra.mxu0 %v268
        %v364 = vpop.f32.mrf.mxu0
        %v365 = vadd.f32 0.0, %v364
        %366 = vdwg.mxu0
        %vm367 = vcmask 130048
        %368 = vst.msk [vmem:[%s206] sm:$0xff] %vm367, %v344
        %369 = vst.msk [vmem:[%s206 + $0x8] sm:$0xff] %vm367, %v347
        %370 = vst.msk [vmem:[%s206 + $0x10] sm:$0xff] %vm367, %v350
        %371 = vst.msk [vmem:[%s206 + $0x18] sm:$0xff] %vm367, %v353
        %372 = vst.msk [vmem:[%s206 + $0x20] sm:$0xff] %vm367, %v356
        %373 = vst.msk [vmem:[%s206 + $0x28] sm:$0xff] %vm367, %v359
        %374 = vst.msk [vmem:[%s206 + $0x30] sm:$0xff] %vm367, %v362
        %375 = vst.msk [vmem:[%s206 + $0x38] sm:$0xff] %vm367, %v365
        %s376 = sand.u32 %s92, 1
        %s377 = sand.u32 %s92, 1
        %s378 = smul.addr %s377, 64
        %s379 = scalar_lea.vmem [#allocation2], %s378
        %s380 = sand.u32 %s118, 1
        %s381 = sand.u32 %s118, 1
        %s382 = smul.addr %s381, 64
        %s383 = scalar_lea.vmem [#allocation3], %s382
        // Predicated region
        $region33: #{tpu_custom_call.1} parent=31 // pred_check
          %p384 = pneg %p102
        $region34: #{tpu_custom_call.1} parent=31 // pred_check_branch
          %386 = sbr.rel (%p384) target = $region36
        $region35: #{tpu_custom_call.1} parent=31 // pred_region
          %s387 = smul.u32 8, %s16
          %s388 = ssub.s32 9, %s387
          %p389 = scmp.lt.s32.totalorder %s388, 8
          %s390 = scalar_select %p389, %s388, 8
          %s391 = smul.u32 8, %s390
          %p392 = scmp.ne.s32.totalorder 0, %s391
          %s393 = smul.addr %s387, 8
          %s394 = scalar_lea.vmem %s3, %s393
          // Predicated region
          $region37: #{tpu_custom_call.1} parent=35 // pred_check
            %p395 = pneg %p392
          $region38: #{tpu_custom_call.1} parent=35 // pred_check_branch
            %397 = sbr.rel (%p395) target = $region40
          $region39: #{tpu_custom_call.1} parent=35 // pred_region
            // Predicated region
            $region41: #{tpu_custom_call.1} parent=39 // pred_check
              _
            $region42: #{tpu_custom_call.1} parent=39 // pred_check_branch
              %399 = sbr.rel (0) target = $region44
            $region43: #{tpu_custom_call.1} parent=39 // pred_region
              // Predicated region
              $region63: #{tpu_custom_call.1} parent=43 // pred_check
                _
              $region64: #{tpu_custom_call.1} parent=43 // pred_check_branch
                %463 = sbr.rel (0) target = $region66
              $region65: #{tpu_custom_call.1} parent=43 // pred_region
                %s464 = sshrl.u32 %s390, 3
                // While loop
                $region67: #{tpu_custom_call.1} parent=65 // loop_pre_header
                  _
                $region68: #{tpu_custom_call.1} parent=65 // loop_header
                  %s466 = sphi 0, %s468
                  %p467 = scmp.ge.s32.totalorder %s466, %s464
                  %s471 = sphi 0, %s492
                  %s472 = sphi %s379, %s495
                  %s473 = sphi %s394, %s496
                $region69: #{tpu_custom_call.1} parent=65 // loop_header_branch
                  %470 = sbr.rel (%p467) target = $region73
                $region70: #{tpu_custom_call.1} parent=65 // loop_body
                  %v474 = vld [vmem:[%s472] sm:$0xff]
                  %475 = vst [vmem:[%s473] sm:$0xff] %v474
                  %v476 = vld [vmem:[%s472 + $0x8] sm:$0xff]
                  %477 = vst [vmem:[%s473 + $0x8] sm:$0xff] %v476
                  %v478 = vld [vmem:[%s472 + $0x10] sm:$0xff]
                  %479 = vst [vmem:[%s473 + $0x10] sm:$0xff] %v478
                  %v480 = vld [vmem:[%s472 + $0x18] sm:$0xff]
                  %481 = vst [vmem:[%s473 + $0x18] sm:$0xff] %v480
                  %v482 = vld [vmem:[%s472 + $0x20] sm:$0xff]
                  %483 = vst [vmem:[%s473 + $0x20] sm:$0xff] %v482
                  %v484 = vld [vmem:[%s472 + $0x28] sm:$0xff]
                  %485 = vst [vmem:[%s473 + $0x28] sm:$0xff] %v484
                  %v486 = vld [vmem:[%s472 + $0x30] sm:$0xff]
                  %487 = vst [vmem:[%s473 + $0x30] sm:$0xff] %v486
                  %v488 = vld [vmem:[%s472 + $0x38] sm:$0xff]
                  %489 = vst [vmem:[%s473 + $0x38] sm:$0xff] %v488
                  %s490 = sadd.s32 1, %s471
                  %p491 = scmp.ge.s32.totalorder %s490, %s464
                  %s492 = scalar_select %p491, 0, %s490
                  %s493 = smul.u32 %s492, 64
                  %s494 = smul.u32 %s492, 64
                  %s495 = scalar_lea.vmem %s379, %s493 [#allocation2]
                  %s496 = scalar_lea.vmem %s394, %s494
                $region71: #{tpu_custom_call.1} parent=65 // loop_footer
                  %s468 = sadd.s32 %s466, 1
                $region72: #{tpu_custom_call.1} parent=65 // loop_footer_branch
                  %465 = sbr.rel target = $region68
                $region73: #{tpu_custom_call.1} parent=65 // loop_exit
                  _
                %s497 = sshrl.u32 %s390, 3
                %s498 = sand.u32 %s390, 7
                %s499 = smul.u32 %s497, 8
                %s500 = smul.u32 8, %s499
                %s501 = scalar_lea.vmem %s379, %s500 [#allocation2]
                %s502 = smul.u32 8, %s499
                %s503 = scalar_lea.vmem %s394, %s502
                // While loop
                $region74: #{tpu_custom_call.1} parent=65 // loop_pre_header
                  _
                $region75: #{tpu_custom_call.1} parent=65 // loop_header
                  %s505 = sphi 0, %s507
                  %p506 = scmp.ge.s32.totalorder %s505, %s498
                  %s510 = sphi 0, %s517
                  %s511 = sphi %s501, %s520
                  %s512 = sphi %s503, %s521
                $region76: #{tpu_custom_call.1} parent=65 // loop_header_branch
                  %509 = sbr.rel (%p506) target = $region80
                $region77: #{tpu_custom_call.1} parent=65 // loop_body
                  %v513 = vld [vmem:[%s511] sm:$0xff]
                  %514 = vst [vmem:[%s512] sm:$0xff] %v513
                  %s515 = sadd.s32 1, %s510
                  %p516 = scmp.ge.s32.totalorder %s515, %s498
                  %s517 = scalar_select %p516, 0, %s515
                  %s518 = smul.u32 %s517, 8
                  %s519 = smul.u32 %s517, 8
                  %s520 = scalar_lea.vmem %s501, %s518 [#allocation2]
                  %s521 = scalar_lea.vmem %s503, %s519
                $region78: #{tpu_custom_call.1} parent=65 // loop_footer
                  %s507 = sadd.s32 %s505, 1
                $region79: #{tpu_custom_call.1} parent=65 // loop_footer_branch
                  %504 = sbr.rel target = $region75
                $region80: #{tpu_custom_call.1} parent=65 // loop_exit
                  _
              $region66: #{tpu_custom_call.1} parent=43 // pred_fallthru
                _
              // Predicated region
              $region81: #{tpu_custom_call.1} parent=43 // pred_check
                _
              $region82: #{tpu_custom_call.1} parent=43 // pred_check_branch
                %523 = sbr.rel target = $region84
              $region83: #{tpu_custom_call.1} parent=43 // pred_region
                _
              $region84: #{tpu_custom_call.1} parent=43 // pred_fallthru
                _
            $region44: #{tpu_custom_call.1} parent=39 // pred_fallthru
              _
            // Predicated region
            $region45: #{tpu_custom_call.1} parent=39 // pred_check
              _
            $region46: #{tpu_custom_call.1} parent=39 // pred_check_branch
              %401 = sbr.rel target = $region48
            $region47: #{tpu_custom_call.1} parent=39 // pred_region
              %s403 = ssub.s32 256, 1
              %s404 = sshrl.u32 %s390, 3
              // While loop
              $region49: #{tpu_custom_call.1} parent=47 // loop_pre_header
                _
              $region50: #{tpu_custom_call.1} parent=47 // loop_header
                %s406 = sphi 0, %s408
                %p407 = scmp.ge.s32.totalorder %s406, %s404
                %s411 = sphi 0, %s432
                %s412 = sphi %s379, %s435
                %s413 = sphi %s394, %s436
              $region51: #{tpu_custom_call.1} parent=47 // loop_header_branch
                %410 = sbr.rel (%p407) target = $region55
              $region52: #{tpu_custom_call.1} parent=47 // loop_body
                %v414 = vld [vmem:[%s412] sm:%s403]
                %415 = vst [vmem:[%s413] sm:%s403] %v414
                %v416 = vld [vmem:[%s412 + $0x8] sm:%s403]
                %417 = vst [vmem:[%s413 + $0x8] sm:%s403] %v416
                %v418 = vld [vmem:[%s412 + $0x10] sm:%s403]
                %419 = vst [vmem:[%s413 + $0x10] sm:%s403] %v418
                %v420 = vld [vmem:[%s412 + $0x18] sm:%s403]
                %421 = vst [vmem:[%s413 + $0x18] sm:%s403] %v420
                %v422 = vld [vmem:[%s412 + $0x20] sm:%s403]
                %423 = vst [vmem:[%s413 + $0x20] sm:%s403] %v422
                %v424 = vld [vmem:[%s412 + $0x28] sm:%s403]
                %425 = vst [vmem:[%s413 + $0x28] sm:%s403] %v424
                %v426 = vld [vmem:[%s412 + $0x30] sm:%s403]
                %427 = vst [vmem:[%s413 + $0x30] sm:%s403] %v426
                %v428 = vld [vmem:[%s412 + $0x38] sm:%s403]
                %429 = vst [vmem:[%s413 + $0x38] sm:%s403] %v428
                %s430 = sadd.s32 1, %s411
                %p431 = scmp.ge.s32.totalorder %s430, %s404
                %s432 = scalar_select %p431, 0, %s430
                %s433 = smul.u32 %s432, 64
                %s434 = smul.u32 %s432, 64
                %s435 = scalar_lea.vmem %s379, %s433 [#allocation2]
                %s436 = scalar_lea.vmem %s394, %s434
              $region53: #{tpu_custom_call.1} parent=47 // loop_footer
                %s408 = sadd.s32 %s406, 1
              $region54: #{tpu_custom_call.1} parent=47 // loop_footer_branch
                %405 = sbr.rel target = $region50
              $region55: #{tpu_custom_call.1} parent=47 // loop_exit
                _
              %s437 = sshrl.u32 %s390, 3
              %s438 = sand.u32 %s390, 7
              %s439 = smul.u32 %s437, 8
              %s440 = smul.u32 8, %s439
              %s441 = scalar_lea.vmem %s379, %s440 [#allocation2]
              %s442 = smul.u32 8, %s439
              %s443 = scalar_lea.vmem %s394, %s442
              // While loop
              $region56: #{tpu_custom_call.1} parent=47 // loop_pre_header
                _
              $region57: #{tpu_custom_call.1} parent=47 // loop_header
                %s445 = sphi 0, %s447
                %p446 = scmp.ge.s32.totalorder %s445, %s438
                %s450 = sphi 0, %s457
                %s451 = sphi %s441, %s460
                %s452 = sphi %s443, %s461
              $region58: #{tpu_custom_call.1} parent=47 // loop_header_branch
                %449 = sbr.rel (%p446) target = $region62
              $region59: #{tpu_custom_call.1} parent=47 // loop_body
                %v453 = vld [vmem:[%s451] sm:%s403]
                %454 = vst [vmem:[%s452] sm:%s403] %v453
                %s455 = sadd.s32 1, %s450
                %p456 = scmp.ge.s32.totalorder %s455, %s438
                %s457 = scalar_select %p456, 0, %s455
                %s458 = smul.u32 %s457, 8
                %s459 = smul.u32 %s457, 8
                %s460 = scalar_lea.vmem %s441, %s458 [#allocation2]
                %s461 = scalar_lea.vmem %s443, %s459
              $region60: #{tpu_custom_call.1} parent=47 // loop_footer
                %s447 = sadd.s32 %s445, 1
              $region61: #{tpu_custom_call.1} parent=47 // loop_footer_branch
                %444 = sbr.rel target = $region57
              $region62: #{tpu_custom_call.1} parent=47 // loop_exit
                _
            $region48: #{tpu_custom_call.1} parent=39 // pred_fallthru
              _
          $region40: #{tpu_custom_call.1} parent=35 // pred_fallthru
            _
          %524 = vnop
        $region36: #{tpu_custom_call.1} parent=31 // pred_fallthru
          _
        // Predicated region
        $region85: #{tpu_custom_call.1} parent=31 // pred_check
          %p525 = pneg %p128
        $region86: #{tpu_custom_call.1} parent=31 // pred_check_branch
          %527 = sbr.rel (%p525) target = $region88
        $region87: #{tpu_custom_call.1} parent=31 // pred_region
          %s528 = smul.u32 8, %s16
          %s529 = ssub.s32 9, %s528
          %p530 = scmp.lt.s32.totalorder %s529, 8
          %s531 = scalar_select %p530, %s529, 8
          %s532 = smul.u32 8, %s531
          %p533 = scmp.ne.s32.totalorder 0, %s532
          %s534 = smul.addr %s528, 8
          %s535 = scalar_lea.vmem %s4, %s534
          // Predicated region
          $region89: #{tpu_custom_call.1} parent=87 // pred_check
            %p536 = pneg %p533
          $region90: #{tpu_custom_call.1} parent=87 // pred_check_branch
            %538 = sbr.rel (%p536) target = $region92
          $region91: #{tpu_custom_call.1} parent=87 // pred_region
            // Predicated region
            $region93: #{tpu_custom_call.1} parent=91 // pred_check
              _
            $region94: #{tpu_custom_call.1} parent=91 // pred_check_branch
              %540 = sbr.rel (0) target = $region96
            $region95: #{tpu_custom_call.1} parent=91 // pred_region
              // Predicated region
              $region115: #{tpu_custom_call.1} parent=95 // pred_check
                _
              $region116: #{tpu_custom_call.1} parent=95 // pred_check_branch
                %604 = sbr.rel (0) target = $region118
              $region117: #{tpu_custom_call.1} parent=95 // pred_region
                %s605 = sshrl.u32 %s531, 3
                // While loop
                $region119: #{tpu_custom_call.1} parent=117 // loop_pre_header
                  _
                $region120: #{tpu_custom_call.1} parent=117 // loop_header
                  %s607 = sphi 0, %s609
                  %p608 = scmp.ge.s32.totalorder %s607, %s605
                  %s612 = sphi 0, %s633
                  %s613 = sphi %s383, %s636
                  %s614 = sphi %s535, %s637
                $region121: #{tpu_custom_call.1} parent=117 // loop_header_branch
                  %611 = sbr.rel (%p608) target = $region125
                $region122: #{tpu_custom_call.1} parent=117 // loop_body
                  %v615 = vld [vmem:[%s613] sm:$0xff]
                  %616 = vst [vmem:[%s614] sm:$0xff] %v615
                  %v617 = vld [vmem:[%s613 + $0x8] sm:$0xff]
                  %618 = vst [vmem:[%s614 + $0x8] sm:$0xff] %v617
                  %v619 = vld [vmem:[%s613 + $0x10] sm:$0xff]
                  %620 = vst [vmem:[%s614 + $0x10] sm:$0xff] %v619
                  %v621 = vld [vmem:[%s613 + $0x18] sm:$0xff]
                  %622 = vst [vmem:[%s614 + $0x18] sm:$0xff] %v621
                  %v623 = vld [vmem:[%s613 + $0x20] sm:$0xff]
                  %624 = vst [vmem:[%s614 + $0x20] sm:$0xff] %v623
                  %v625 = vld [vmem:[%s613 + $0x28] sm:$0xff]
                  %626 = vst [vmem:[%s614 + $0x28] sm:$0xff] %v625
                  %v627 = vld [vmem:[%s613 + $0x30] sm:$0xff]
                  %628 = vst [vmem:[%s614 + $0x30] sm:$0xff] %v627
                  %v629 = vld [vmem:[%s613 + $0x38] sm:$0xff]
                  %630 = vst [vmem:[%s614 + $0x38] sm:$0xff] %v629
                  %s631 = sadd.s32 1, %s612
                  %p632 = scmp.ge.s32.totalorder %s631, %s605
                  %s633 = scalar_select %p632, 0, %s631
                  %s634 = smul.u32 %s633, 64
                  %s635 = smul.u32 %s633, 64
                  %s636 = scalar_lea.vmem %s383, %s634 [#allocation3]
                  %s637 = scalar_lea.vmem %s535, %s635
                $region123: #{tpu_custom_call.1} parent=117 // loop_footer
                  %s609 = sadd.s32 %s607, 1
                $region124: #{tpu_custom_call.1} parent=117 // loop_footer_branch
                  %606 = sbr.rel target = $region120
                $region125: #{tpu_custom_call.1} parent=117 // loop_exit
                  _
                %s638 = sshrl.u32 %s531, 3
                %s639 = sand.u32 %s531, 7
                %s640 = smul.u32 %s638, 8
                %s641 = smul.u32 8, %s640
                %s642 = scalar_lea.vmem %s383, %s641 [#allocation3]
                %s643 = smul.u32 8, %s640
                %s644 = scalar_lea.vmem %s535, %s643
                // While loop
                $region126: #{tpu_custom_call.1} parent=117 // loop_pre_header
                  _
                $region127: #{tpu_custom_call.1} parent=117 // loop_header
                  %s646 = sphi 0, %s648
                  %p647 = scmp.ge.s32.totalorder %s646, %s639
                  %s651 = sphi 0, %s658
                  %s652 = sphi %s642, %s661
                  %s653 = sphi %s644, %s662
                $region128: #{tpu_custom_call.1} parent=117 // loop_header_branch
                  %650 = sbr.rel (%p647) target = $region132
                $region129: #{tpu_custom_call.1} parent=117 // loop_body
                  %v654 = vld [vmem:[%s652] sm:$0xff]
                  %655 = vst [vmem:[%s653] sm:$0xff] %v654
                  %s656 = sadd.s32 1, %s651
                  %p657 = scmp.ge.s32.totalorder %s656, %s639
                  %s658 = scalar_select %p657, 0, %s656
                  %s659 = smul.u32 %s658, 8
                  %s660 = smul.u32 %s658, 8
                  %s661 = scalar_lea.vmem %s642, %s659 [#allocation3]
                  %s662 = scalar_lea.vmem %s644, %s660
                $region130: #{tpu_custom_call.1} parent=117 // loop_footer
                  %s648 = sadd.s32 %s646, 1
                $region131: #{tpu_custom_call.1} parent=117 // loop_footer_branch
                  %645 = sbr.rel target = $region127
                $region132: #{tpu_custom_call.1} parent=117 // loop_exit
                  _
              $region118: #{tpu_custom_call.1} parent=95 // pred_fallthru
                _
              // Predicated region
              $region133: #{tpu_custom_call.1} parent=95 // pred_check
                _
              $region134: #{tpu_custom_call.1} parent=95 // pred_check_branch
                %664 = sbr.rel target = $region136
              $region135: #{tpu_custom_call.1} parent=95 // pred_region
                _
              $region136: #{tpu_custom_call.1} parent=95 // pred_fallthru
                _
            $region96: #{tpu_custom_call.1} parent=91 // pred_fallthru
              _
            // Predicated region
            $region97: #{tpu_custom_call.1} parent=91 // pred_check
              _
            $region98: #{tpu_custom_call.1} parent=91 // pred_check_branch
              %542 = sbr.rel target = $region100
            $region99: #{tpu_custom_call.1} parent=91 // pred_region
              %s544 = ssub.s32 256, 1
              %s545 = sshrl.u32 %s531, 3
              // While loop
              $region101: #{tpu_custom_call.1} parent=99 // loop_pre_header
                _
              $region102: #{tpu_custom_call.1} parent=99 // loop_header
                %s547 = sphi 0, %s549
                %p548 = scmp.ge.s32.totalorder %s547, %s545
                %s552 = sphi 0, %s573
                %s553 = sphi %s383, %s576
                %s554 = sphi %s535, %s577
              $region103: #{tpu_custom_call.1} parent=99 // loop_header_branch
                %551 = sbr.rel (%p548) target = $region107
              $region104: #{tpu_custom_call.1} parent=99 // loop_body
                %v555 = vld [vmem:[%s553] sm:%s544]
                %556 = vst [vmem:[%s554] sm:%s544] %v555
                %v557 = vld [vmem:[%s553 + $0x8] sm:%s544]
                %558 = vst [vmem:[%s554 + $0x8] sm:%s544] %v557
                %v559 = vld [vmem:[%s553 + $0x10] sm:%s544]
                %560 = vst [vmem:[%s554 + $0x10] sm:%s544] %v559
                %v561 = vld [vmem:[%s553 + $0x18] sm:%s544]
                %562 = vst [vmem:[%s554 + $0x18] sm:%s544] %v561
                %v563 = vld [vmem:[%s553 + $0x20] sm:%s544]
                %564 = vst [vmem:[%s554 + $0x20] sm:%s544] %v563
                %v565 = vld [vmem:[%s553 + $0x28] sm:%s544]
                %566 = vst [vmem:[%s554 + $0x28] sm:%s544] %v565
                %v567 = vld [vmem:[%s553 + $0x30] sm:%s544]
                %568 = vst [vmem:[%s554 + $0x30] sm:%s544] %v567
                %v569 = vld [vmem:[%s553 + $0x38] sm:%s544]
                %570 = vst [vmem:[%s554 + $0x38] sm:%s544] %v569
                %s571 = sadd.s32 1, %s552
                %p572 = scmp.ge.s32.totalorder %s571, %s545
                %s573 = scalar_select %p572, 0, %s571
                %s574 = smul.u32 %s573, 64
                %s575 = smul.u32 %s573, 64
                %s576 = scalar_lea.vmem %s383, %s574 [#allocation3]
                %s577 = scalar_lea.vmem %s535, %s575
              $region105: #{tpu_custom_call.1} parent=99 // loop_footer
                %s549 = sadd.s32 %s547, 1
              $region106: #{tpu_custom_call.1} parent=99 // loop_footer_branch
                %546 = sbr.rel target = $region102
              $region107: #{tpu_custom_call.1} parent=99 // loop_exit
                _
              %s578 = sshrl.u32 %s531, 3
              %s579 = sand.u32 %s531, 7
              %s580 = smul.u32 %s578, 8
              %s581 = smul.u32 8, %s580
              %s582 = scalar_lea.vmem %s383, %s581 [#allocation3]
              %s583 = smul.u32 8, %s580
              %s584 = scalar_lea.vmem %s535, %s583
              // While loop
              $region108: #{tpu_custom_call.1} parent=99 // loop_pre_header
                _
              $region109: #{tpu_custom_call.1} parent=99 // loop_header
                %s586 = sphi 0, %s588
                %p587 = scmp.ge.s32.totalorder %s586, %s579
                %s591 = sphi 0, %s598
                %s592 = sphi %s582, %s601
                %s593 = sphi %s584, %s602
              $region110: #{tpu_custom_call.1} parent=99 // loop_header_branch
                %590 = sbr.rel (%p587) target = $region114
              $region111: #{tpu_custom_call.1} parent=99 // loop_body
                %v594 = vld [vmem:[%s592] sm:%s544]
                %595 = vst [vmem:[%s593] sm:%s544] %v594
                %s596 = sadd.s32 1, %s591
                %p597 = scmp.ge.s32.totalorder %s596, %s579
                %s598 = scalar_select %p597, 0, %s596
                %s599 = smul.u32 %s598, 8
                %s600 = smul.u32 %s598, 8
                %s601 = scalar_lea.vmem %s582, %s599 [#allocation3]
                %s602 = scalar_lea.vmem %s584, %s600
              $region112: #{tpu_custom_call.1} parent=99 // loop_footer
                %s588 = sadd.s32 %s586, 1
              $region113: #{tpu_custom_call.1} parent=99 // loop_footer_branch
                %585 = sbr.rel target = $region109
              $region114: #{tpu_custom_call.1} parent=99 // loop_exit
                _
            $region100: #{tpu_custom_call.1} parent=91 // pred_fallthru
              _
          $region92: #{tpu_custom_call.1} parent=87 // pred_fallthru
            _
          %665 = vnop
        $region88: #{tpu_custom_call.1} parent=31 // pred_fallthru
          _
      $region32: #{tpu_custom_call.1} parent=5 // pred_fallthru
        _
      %p666 = scmp.le.s32.totalorder 2, %s11
      // Predicated region
      $region137: #{tpu_custom_call.1} parent=5 // pred_check
        %p667 = pneg %p666
      $region138: #{tpu_custom_call.1} parent=5 // pred_check_branch
        %669 = sbr.rel (%p667) target = $region140
      $region139: #{tpu_custom_call.1} parent=5 // pred_region
        %s670 = ssub.s32 %s11, 2
        // Predicated region
        $region141: #{tpu_custom_call.1} parent=139 // pred_check
          %p671 = pneg %p108
        $region142: #{tpu_custom_call.1} parent=139 // pred_check_branch
          %673 = sbr.rel (%p671) target = $region144
        $region143: #{tpu_custom_call.1} parent=139 // pred_region
          %s674 = sand.u32 %s93, 1
          %s675 = sand.u32 %s93, 1
          %s676 = smul.addr %s675, 64
          %s677 = scalar_lea.vmem [#allocation2], %s676
        $region144: #{tpu_custom_call.1} parent=139 // pred_fallthru
          _
        // Predicated region
        $region145: #{tpu_custom_call.1} parent=139 // pred_check
          %p678 = pneg %p134
        $region146: #{tpu_custom_call.1} parent=139 // pred_check_branch
          %680 = sbr.rel (%p678) target = $region148
        $region147: #{tpu_custom_call.1} parent=139 // pred_region
          %s681 = sand.u32 %s119, 1
          %s682 = sand.u32 %s119, 1
          %s683 = smul.addr %s682, 64
          %s684 = scalar_lea.vmem [#allocation3], %s683
        $region148: #{tpu_custom_call.1} parent=139 // pred_fallthru
          _
      $region140: #{tpu_custom_call.1} parent=5 // pred_fallthru
        _
    $region6: #{tpu_custom_call.1} parent=1 // loop_footer
      %s15 = sadd.s32 1, %s11
    $region7: #{tpu_custom_call.1} parent=1 // loop_footer_branch
      %10 = sbr.rel target = $region3
    $region8: #{tpu_custom_call.1} parent=1 // loop_exit
      _

</llo_original>
